<compile_context>
chip_gen: v7x
topology: tpu7x:2x2x1
jax: 0.10.0
libtpu: 0.0.40
codegen_flags: <defaults>
</compile_context>

<pallas_src>
import functools

import jax
import jax.numpy as jnp
from jax import lax
from jax.experimental import pallas as pl
from jax.experimental.pallas import tpu as pltpu


_GUARD = 128  # Lane guard on each side of the flat padded image: >= W+3 so all
              # shifted tap slices stay in bounds, and a multiple of 128 so the
              # hidden-activation store starts on a lane-tile boundary.


def _extractor_kernel(num_layers, H, W, G, *refs):
    """One grid step = one image of the batch.

    refs layout:
      refs[0]               x_ref     (Cin, S + 2G)      bf16  guarded flat image
      refs[1]               mask_ref  (1, S)             f32   1.0 at interior px
      refs[2 : 2+L]         w_refs    (Cout_l, 9*Cin_l)  bf16
      refs[2+L : 2+2L]      b_refs    (Cout_l, 1)        f32
      refs[2+2L]            o_ref     (Cout, S)          f32
      refs[3+2L]            patch_ref (9*max_cin, S)     f32   scratch (im2col)
      refs[4+2L] (L > 1)    h_ref     (Chid, S + 2G)     bf16  scratch (hidden)
    """
    Wp = W + 2
    S = (H + 2) * Wp

    x_ref, mask_ref = refs[0], refs[1]
    w_refs = refs[2:2 + num_layers]
    b_refs = refs[2 + num_layers:2 + 2 * num_layers]
    o_ref = refs[2 + 2 * num_layers]
    patch_ref = refs[3 + 2 * num_layers]
    h_ref = refs[4 + 2 * num_layers] if num_layers > 1 else None

    # Flat-index offset of each 3x3 tap relative to the output position.
    taps = [(dy - 1) * Wp + (dx - 1) for dy in range(3) for dx in range(3)]

    # Interior-pixel mask, hoisted once.  jnp.where (a select) also kills any
    # NaN/Inf garbage produced by wrap / guard reads for pad positions.
    interior = mask_ref[...] != 0.0                       # (1, S) bool

    if h_ref is not None:
        # Zero ONLY the two guard bands, once.  The data span [G, G+S) is fully
        # overwritten every layer, so it is never zero-filled (the intra-image
        # pad positions are zeroed by the select-mask below instead).
        chid = h_ref.shape[0]
        h_ref[:, 0:G] = jnp.zeros((chid, G), h_ref.dtype)
        h_ref[:, G + S:G + S + G] = jnp.zeros((chid, G), h_ref.dtype)

    def conv3x3(src_ref, w_ref, b_ref):
        # src_ref: (Cin_l, S+2G) bf16; w_ref: (Cout_l, 9*Cin_l) bf16; b: (Cout_l,1)
        cin = src_ref.shape[0]
        # im2col: assemble the (9*Cin_l, S) patch ONCE from 9 shifted
        # lane-slices, then one MXU matmul with K = 9*Cin_l.
        for t, d in enumerate(taps):
            patch_ref[t * cin:(t + 1) * cin, :] = (
                src_ref[:, G + d:G + d + S].astype(patch_ref.dtype))
        patch = patch_ref[0:9 * cin, :].astype(jnp.bfloat16)
        y = jnp.dot(w_ref[...], patch, preferred_element_type=jnp.float32)
        return y + b_ref[...]                             # lane-dense bias add

    src_ref = x_ref
    for layer in range(num_layers - 1):
        y = conv3x3(src_ref, w_refs[layer], b_refs[layer])        # (Chid, S) f32
        # ReLU (between layers only) + zero the image's own pad rows/cols so
        # the next conv sees proper zero padding.
        y = jnp.where(interior, jnp.maximum(y, 0.0), 0.0)
        h_ref[:, G:G + S] = y.astype(h_ref.dtype)
        src_ref = h_ref

    y = conv3x3(src_ref, w_refs[-1], b_refs[-1])                  # (Cout, S) f32
    o_ref[...] = jnp.where(interior, y, 0.0).astype(o_ref.dtype)


def conv2d_extractor_forward(x_nchw, weights, biases):
    """Pallas implementation of Conv2dExtractor.forward (default conv2d path).

    Args:
      x_nchw:  (N, Cin, H, W) float32   (PyTorch NCHW convention)
      weights: list of length `depth`, each (Cout_l, Cin_l, 3, 3)  (OIHW)
      biases:  list of length `depth`, each (Cout_l,)
    Returns:
      (N, Cout_last, H, W) float32
    """
    N, Cin, H, W = x_nchw.shape
    L = len(weights)
    Hp, Wp = H + 2, W + 2
    S = Hp * Wp
    G = _GUARD
    Sg = S + 2 * G
    Cout = weights[-1].shape[0]
    Chid = weights[0].shape[0]
    for w in weights[:-1]:
        assert w.shape[0] == Chid, "all hidden layers must share hidden_channels"
    max_cin = max(w.shape[1] for w in weights)

    # ---- one-time layout prep (plain XLA, outside the kernel) ----
    # NCHW -> channel-major flat padded spatial with a lane guard on each side,
    # bf16 activations (halves activation DMA, MXU-native operand dtype).
    x_pad = jnp.pad(x_nchw, ((0, 0), (0, 0), (1, 1), (1, 1))).reshape(N, Cin, S)
    x_prep = jnp.pad(x_pad, ((0, 0), (0, 0), (G, G))).astype(jnp.bfloat16)

    # (Cout, Cin, 3, 3) -> (Cout, 9*Cin); column index = (dy*3+dx)*Cin + c,
    # matching the patch-row order assembled in the kernel.
    w_prep = [jnp.transpose(w, (0, 2, 3, 1))
              .reshape(w.shape[0], 9 * w.shape[1]).astype(jnp.bfloat16)
              for w in weights]
    b_prep = [b.astype(jnp.float32).reshape(-1, 1) for b in biases]

    # Interior-pixel mask over the flat padded image (1.0 inside, 0.0 on pads).
    mask = (jnp.zeros((Hp, Wp), jnp.float32).at[1:-1, 1:-1].set(1.0)
            .reshape(1, S))

    flops = sum(2 * N * S * 9 * w.shape[1] * w.shape[0] for w in weights)
    bytes_accessed = (int(x_prep.size) * 2
                      + sum(int(w.size) * 2 for w in w_prep)
                      + sum(int(b.size) * 4 for b in b_prep)
                      + int(mask.size) * 4
                      + N * Cout * S * 4)

    in_specs = (
        [pl.BlockSpec((None, Cin, Sg), lambda n: (n, 0, 0)),   # one image / step
         pl.BlockSpec((1, S), lambda n: (0, 0))]               # mask: resident
        + [pl.BlockSpec(w.shape, lambda n: (0, 0)) for w in w_prep]
        + [pl.BlockSpec(b.shape, lambda n: (0, 0)) for b in b_prep])

    scratch_shapes = [pltpu.VMEM((9 * max_cin, S), jnp.float32)]   # im2col patch
    if L > 1:
        scratch_shapes.append(pltpu.VMEM((Chid, Sg), jnp.bfloat16))  # hidden act

    out_flat = pl.pallas_call(
        functools.partial(_extractor_kernel, L, H, W, G),
        out_shape=jax.ShapeDtypeStruct((N, Cout, S), x_nchw.dtype),
        grid=(N,),
        in_specs=in_specs,
        out_specs=pl.BlockSpec((None, Cout, S), lambda n: (n, 0, 0)),
        scratch_shapes=scratch_shapes,
        compiler_params=pltpu.CompilerParams(
            dimension_semantics=("parallel",)),   # v7x megacore; no-op v5e/v6e
        cost_estimate=pl.CostEstimate(flops=flops, transcendentals=0,
                                      bytes_accessed=bytes_accessed),
    )(x_prep, mask, *w_prep, *b_prep)

    # Drop the pad rows/cols; result is already NCHW.
    return out_flat.reshape(N, Cout, Hp, Wp)[:, :, 1:-1, 1:-1]


def _init_conv_params(key, cin, chid, cout, depth):
    """Deterministic kaiming-normal conv weights + small uniform biases."""
    if depth == 1:
        dims = [(cout, cin)]
    else:
        dims = [(chid, cin)] + [(chid, chid)] * (depth - 2) + [(cout, chid)]
    weights, biases = [], []
    for i, (co, ci) in enumerate(dims):
        kw, kb = jax.random.split(jax.random.fold_in(key, i))
        fan_in = ci * 9
        std = (2.0 / fan_in) ** 0.5
        weights.append(std * jax.random.normal(kw, (co, ci, 3, 3), jnp.float32))
        bound = 1.0 / fan_in ** 0.5
        biases.append(jax.random.uniform(kb, (co,), jnp.float32, -bound, bound))
    return weights, biases


def _reference_forward(x, weights, biases, operand_dtype=None):
    """Pure-JAX reference of the same semantics (3x3 conv stack, ReLU between).

    If `operand_dtype` is given, inputs / weights / hidden activations are
    rounded to that dtype (mirroring the kernel's bf16 MXU operands) while
    still accumulating in f32, so the kernel can be checked tightly.
    """
    def q(a):
        return (a.astype(operand_dtype).astype(jnp.float32)
                if operand_dtype is not None else a)

    h = q(x)
    L = len(weights)
    for l, (w, b) in enumerate(zip(weights, biases)):
        h = lax.conv_general_dilated(
            h, q(w), window_strides=(1, 1), padding=((1, 1), (1, 1)),
            dimension_numbers=("NCHW", "OIHW", "NCHW"),
            precision=lax.Precision.HIGHEST)
        h = h + b.reshape(1, -1, 1, 1)
        if l < L - 1:
            h = q(jnp.maximum(h, 0.0))
    return h


if __name__ == "__main__":
    N, CIN, H, W = 2, 4, 16, 16
    CHID, COUT = 32, 16       # expansion-style hidden width, output channels
    DEPTH = 2                 # conv -> ReLU -> conv

    key = jax.random.PRNGKey(0)
    kx, kp = jax.random.split(key)
    x = jax.random.normal(kx, (N, CIN, H, W), jnp.float32)

    # depth=2 configuration (hidden layer + ReLU between).
    weights, biases = _init_conv_params(kp, CIN, CHID, COUT, DEPTH)
    y = jax.block_until_ready(conv2d_extractor_forward(x, weights, biases))
    assert y.shape == (N, COUT, H, W), y.shape
    # Tight check against a reference with the SAME bf16 operand rounding.
    y_ref_bf16 = _reference_forward(x, weights, biases,
                                    operand_dtype=jnp.bfloat16)
    assert jnp.allclose(y, y_ref_bf16, atol=5e-3, rtol=5e-3), float(
        jnp.max(jnp.abs(y - y_ref_bf16)))
    # Looser sanity check against the full-f32 module semantics
    # (bf16 MXU operands -> ~1e-2 scale deviations are expected).
    y_ref_f32 = _reference_forward(x, weights, biases)
    assert jnp.allclose(y, y_ref_f32, atol=8e-2, rtol=8e-2), float(
        jnp.max(jnp.abs(y - y_ref_f32)))

    # depth=1 configuration (Conv2dExtractor default): a single 3x3 conv.
    w1, b1 = _init_conv_params(kp, CIN, CHID, COUT, 1)
    y1 = jax.block_until_ready(conv2d_extractor_forward(x, w1, b1))
    assert y1.shape == (N, COUT, H, W), y1.shape
    y1_ref = _reference_forward(x, w1, b1, operand_dtype=jnp.bfloat16)
    assert jnp.allclose(y1, y1_ref, atol=5e-3, rtol=5e-3), float(
        jnp.max(jnp.abs(y1 - y1_ref)))

    print("KERNEL_OK")
</pallas_src>

<mosaic_0001>
module attributes {stable_mosaic.version = 11 : i64} {
  func.func @_extractor_kernel(%arg0: i32, %arg1: memref<1x4x580xbf16, #tpu.memory_space<vmem>>, %arg2: memref<1x324xf32, #tpu.memory_space<vmem>>, %arg3: memref<32x36xbf16, #tpu.memory_space<vmem>>, %arg4: memref<16x288xbf16, #tpu.memory_space<vmem>>, %arg5: memref<32x1xf32, #tpu.memory_space<vmem>>, %arg6: memref<16x1xf32, #tpu.memory_space<vmem>>, %arg7: memref<1x16x324xf32, #tpu.memory_space<vmem>>, %arg8: memref<288x324xf32, #tpu.memory_space<vmem>>, %arg9: memref<32x580xbf16, #tpu.memory_space<vmem>>) attributes {dimension_semantics = [#tpu.dimension_semantics<parallel>], iteration_bounds = array<i64: 2>, scalar_prefetch = 0 : i64, scratch_operands = 2 : i64, tpu.core_type = #tpu.core_type<tc>, window_params = [{transform_indices = @transform_0, window_bounds = array<i64: 1, 4, 580>}, {pipeline_mode = #tpu.pipeline_mode<synchronous>, transform_indices = @transform_1, window_bounds = array<i64: 1, 324>}, {pipeline_mode = #tpu.pipeline_mode<synchronous>, transform_indices = @transform_2, window_bounds = array<i64: 32, 36>}, {pipeline_mode = #tpu.pipeline_mode<synchronous>, transform_indices = @transform_3, window_bounds = array<i64: 16, 288>}, {pipeline_mode = #tpu.pipeline_mode<synchronous>, transform_indices = @transform_4, window_bounds = array<i64: 32, 1>}, {pipeline_mode = #tpu.pipeline_mode<synchronous>, transform_indices = @transform_5, window_bounds = array<i64: 16, 1>}, {transform_indices = @transform_6, window_bounds = array<i64: 1, 16, 324>}]} {
    %c0 = arith.constant 0 : index
    %c0_0 = arith.constant 0 : index
    %0 = vector.load %arg2[%c0, %c0_0] : memref<1x324xf32, #tpu.memory_space<vmem>>, vector<1x324xf32>
    %cst = arith.constant 0.000000e+00 : f32
    %1 = vector.broadcast %cst : f32 to vector<1x324xf32>
    %2 = arith.cmpf one, %0, %1 : vector<1x324xf32>
    %cst_1 = arith.constant 0.000000e+00 : bf16
    %3 = vector.broadcast %cst_1 : bf16 to vector<32x128xbf16>
    %c0_2 = arith.constant 0 : index
    %c0_3 = arith.constant 0 : index
    %4 = vector.load %arg9[%c0_2, %c0_3] : memref<32x580xbf16, #tpu.memory_space<vmem>>, vector<32x128xbf16>
    tpu.vector_store %arg9[%c0_2, %c0_3], %3 {strides = array<i32>} : memref<32x580xbf16, #tpu.memory_space<vmem>>, vector<32x128xbf16>,
    %cst_4 = arith.constant 0.000000e+00 : bf16
    %5 = vector.broadcast %cst_4 : bf16 to vector<32x128xbf16>
    %c0_5 = arith.constant 0 : index
    %c452 = arith.constant 452 : index
    %6 = vector.load %arg9[%c0_5, %c452] : memref<32x580xbf16, #tpu.memory_space<vmem>>, vector<32x128xbf16>
    tpu.vector_store %arg9[%c0_5, %c452], %5 {strides = array<i32>} : memref<32x580xbf16, #tpu.memory_space<vmem>>, vector<32x128xbf16>,
    %c0_6 = arith.constant 0 : index
    %c0_7 = arith.constant 0 : index
    %c109 = arith.constant 109 : index
    %7 = vector.load %arg1[%c0_6, %c0_7, %c109] : memref<1x4x580xbf16, #tpu.memory_space<vmem>>, vector<1x4x324xbf16>
    %8 = vector.shape_cast %7 : vector<1x4x324xbf16> to vector<4x324xbf16>
    %9 = arith.extf %8 : vector<4x324xbf16> to vector<4x324xf32>
    %c0_8 = arith.constant 0 : index
    %c0_9 = arith.constant 0 : index
    %10 = vector.load %arg8[%c0_8, %c0_9] : memref<288x324xf32, #tpu.memory_space<vmem>>, vector<4x324xf32>
    tpu.vector_store %arg8[%c0_8, %c0_9], %9 {strides = array<i32>} : memref<288x324xf32, #tpu.memory_space<vmem>>, vector<4x324xf32>,
    %c0_10 = arith.constant 0 : index
    %c0_11 = arith.constant 0 : index
    %c110 = arith.constant 110 : index
    %11 = vector.load %arg1[%c0_10, %c0_11, %c110] : memref<1x4x580xbf16, #tpu.memory_space<vmem>>, vector<1x4x324xbf16>
    %12 = vector.shape_cast %11 : vector<1x4x324xbf16> to vector<4x324xbf16>
    %13 = arith.extf %12 : vector<4x324xbf16> to vector<4x324xf32>
    %c4 = arith.constant 4 : index
    %c0_12 = arith.constant 0 : index
    %14 = vector.load %arg8[%c4, %c0_12] : memref<288x324xf32, #tpu.memory_space<vmem>>, vector<4x324xf32>
    tpu.vector_store %arg8[%c4, %c0_12], %13 {strides = array<i32>} : memref<288x324xf32, #tpu.memory_space<vmem>>, vector<4x324xf32>,
    %c0_13 = arith.constant 0 : index
    %c0_14 = arith.constant 0 : index
    %c111 = arith.constant 111 : index
    %15 = vector.load %arg1[%c0_13, %c0_14, %c111] : memref<1x4x580xbf16, #tpu.memory_space<vmem>>, vector<1x4x324xbf16>
    %16 = vector.shape_cast %15 : vector<1x4x324xbf16> to vector<4x324xbf16>
    %17 = arith.extf %16 : vector<4x324xbf16> to vector<4x324xf32>
    %c8 = arith.constant 8 : index
    %c0_15 = arith.constant 0 : index
    %18 = vector.load %arg8[%c8, %c0_15] : memref<288x324xf32, #tpu.memory_space<vmem>>, vector<4x324xf32>
    tpu.vector_store %arg8[%c8, %c0_15], %17 {strides = array<i32>} : memref<288x324xf32, #tpu.memory_space<vmem>>, vector<4x324xf32>,
    %c0_16 = arith.constant 0 : index
    %c0_17 = arith.constant 0 : index
    %c127 = arith.constant 127 : index
    %19 = vector.load %arg1[%c0_16, %c0_17, %c127] : memref<1x4x580xbf16, #tpu.memory_space<vmem>>, vector<1x4x324xbf16>
    %20 = vector.shape_cast %19 : vector<1x4x324xbf16> to vector<4x324xbf16>
    %21 = arith.extf %20 : vector<4x324xbf16> to vector<4x324xf32>
    %c12 = arith.constant 12 : index
    %c0_18 = arith.constant 0 : index
    %22 = vector.load %arg8[%c12, %c0_18] : memref<288x324xf32, #tpu.memory_space<vmem>>, vector<4x324xf32>
    tpu.vector_store %arg8[%c12, %c0_18], %21 {strides = array<i32>} : memref<288x324xf32, #tpu.memory_space<vmem>>, vector<4x324xf32>,
    %c0_19 = arith.constant 0 : index
    %c0_20 = arith.constant 0 : index
    %c128 = arith.constant 128 : index
    %23 = vector.load %arg1[%c0_19, %c0_20, %c128] : memref<1x4x580xbf16, #tpu.memory_space<vmem>>, vector<1x4x324xbf16>
    %24 = vector.shape_cast %23 : vector<1x4x324xbf16> to vector<4x324xbf16>
    %25 = arith.extf %24 : vector<4x324xbf16> to vector<4x324xf32>
    %c16 = arith.constant 16 : index
    %c0_21 = arith.constant 0 : index
    %26 = vector.load %arg8[%c16, %c0_21] : memref<288x324xf32, #tpu.memory_space<vmem>>, vector<4x324xf32>
    tpu.vector_store %arg8[%c16, %c0_21], %25 {strides = array<i32>} : memref<288x324xf32, #tpu.memory_space<vmem>>, vector<4x324xf32>,
    %c0_22 = arith.constant 0 : index
    %c0_23 = arith.constant 0 : index
    %c129 = arith.constant 129 : index
    %27 = vector.load %arg1[%c0_22, %c0_23, %c129] : memref<1x4x580xbf16, #tpu.memory_space<vmem>>, vector<1x4x324xbf16>
    %28 = vector.shape_cast %27 : vector<1x4x324xbf16> to vector<4x324xbf16>
    %29 = arith.extf %28 : vector<4x324xbf16> to vector<4x324xf32>
    %c20 = arith.constant 20 : index
    %c0_24 = arith.constant 0 : index
    %30 = vector.load %arg8[%c20, %c0_24] : memref<288x324xf32, #tpu.memory_space<vmem>>, vector<4x324xf32>
    tpu.vector_store %arg8[%c20, %c0_24], %29 {strides = array<i32>} : memref<288x324xf32, #tpu.memory_space<vmem>>, vector<4x324xf32>,
    %c0_25 = arith.constant 0 : index
    %c0_26 = arith.constant 0 : index
    %c145 = arith.constant 145 : index
    %31 = vector.load %arg1[%c0_25, %c0_26, %c145] : memref<1x4x580xbf16, #tpu.memory_space<vmem>>, vector<1x4x324xbf16>
    %32 = vector.shape_cast %31 : vector<1x4x324xbf16> to vector<4x324xbf16>
    %33 = arith.extf %32 : vector<4x324xbf16> to vector<4x324xf32>
    %c24 = arith.constant 24 : index
    %c0_27 = arith.constant 0 : index
    %34 = vector.load %arg8[%c24, %c0_27] : memref<288x324xf32, #tpu.memory_space<vmem>>, vector<4x324xf32>
    tpu.vector_store %arg8[%c24, %c0_27], %33 {strides = array<i32>} : memref<288x324xf32, #tpu.memory_space<vmem>>, vector<4x324xf32>,
    %c0_28 = arith.constant 0 : index
    %c0_29 = arith.constant 0 : index
    %c146 = arith.constant 146 : index
    %35 = vector.load %arg1[%c0_28, %c0_29, %c146] : memref<1x4x580xbf16, #tpu.memory_space<vmem>>, vector<1x4x324xbf16>
    %36 = vector.shape_cast %35 : vector<1x4x324xbf16> to vector<4x324xbf16>
    %37 = arith.extf %36 : vector<4x324xbf16> to vector<4x324xf32>
    %c28 = arith.constant 28 : index
    %c0_30 = arith.constant 0 : index
    %38 = vector.load %arg8[%c28, %c0_30] : memref<288x324xf32, #tpu.memory_space<vmem>>, vector<4x324xf32>
    tpu.vector_store %arg8[%c28, %c0_30], %37 {strides = array<i32>} : memref<288x324xf32, #tpu.memory_space<vmem>>, vector<4x324xf32>,
    %c0_31 = arith.constant 0 : index
    %c0_32 = arith.constant 0 : index
    %c147 = arith.constant 147 : index
    %39 = vector.load %arg1[%c0_31, %c0_32, %c147] : memref<1x4x580xbf16, #tpu.memory_space<vmem>>, vector<1x4x324xbf16>
    %40 = vector.shape_cast %39 : vector<1x4x324xbf16> to vector<4x324xbf16>
    %41 = arith.extf %40 : vector<4x324xbf16> to vector<4x324xf32>
    %c32 = arith.constant 32 : index
    %c0_33 = arith.constant 0 : index
    %42 = vector.load %arg8[%c32, %c0_33] : memref<288x324xf32, #tpu.memory_space<vmem>>, vector<4x324xf32>
    tpu.vector_store %arg8[%c32, %c0_33], %41 {strides = array<i32>} : memref<288x324xf32, #tpu.memory_space<vmem>>, vector<4x324xf32>,
    %c0_34 = arith.constant 0 : index
    %c0_35 = arith.constant 0 : index
    %43 = vector.load %arg8[%c0_34, %c0_35] : memref<288x324xf32, #tpu.memory_space<vmem>>, vector<36x324xf32>
    %44 = arith.truncf %43 : vector<36x324xf32> to vector<36x324xbf16>
    %c0_36 = arith.constant 0 : index
    %c0_37 = arith.constant 0 : index
    %45 = vector.load %arg3[%c0_36, %c0_37] : memref<32x36xbf16, #tpu.memory_space<vmem>>, vector<32x36xbf16>
    %cst_38 = arith.constant dense<0.000000e+00> : vector<32x324xf32>
    %46 = tpu.matmul %45, %44, %cst_38 {dimension_numbers = #tpu.dot_dimension_numbers<[1], [0], [0], [1], [0, 0, 1, 1], [], []>} : vector<32x36xbf16>, vector<36x324xbf16>, vector<32x324xf32> -> vector<32x324xf32>
    %c0_39 = arith.constant 0 : index
    %c0_40 = arith.constant 0 : index
    %47 = vector.load %arg5[%c0_39, %c0_40] : memref<32x1xf32, #tpu.memory_space<vmem>>, vector<32x1xf32>
    %48 = vector.broadcast %47 : vector<32x1xf32> to vector<32x324xf32>
    %49 = arith.addf %46, %48 : vector<32x324xf32>
    %cst_41 = arith.constant 0.000000e+00 : f32
    %50 = vector.broadcast %cst_41 : f32 to vector<32x324xf32>
    %51 = arith.maximumf %49, %50 : vector<32x324xf32>
    %cst_42 = arith.constant 0.000000e+00 : f32
    %52 = vector.shape_cast %2 : vector<1x324xi1> to vector<1x324xi1>
    %53 = vector.broadcast %52 : vector<1x324xi1> to vector<32x324xi1>
    %54 = vector.broadcast %cst_42 : f32 to vector<32x324xf32>
    %55 = arith.select %53, %51, %54 : vector<32x324xi1>, vector<32x324xf32>
    %56 = arith.truncf %55 : vector<32x324xf32> to vector<32x324xbf16>
    %c0_43 = arith.constant 0 : index
    %c128_44 = arith.constant 128 : index
    %57 = vector.load %arg9[%c0_43, %c128_44] : memref<32x580xbf16, #tpu.memory_space<vmem>>, vector<32x324xbf16>
    tpu.vector_store %arg9[%c0_43, %c128_44], %56 {strides = array<i32>} : memref<32x580xbf16, #tpu.memory_space<vmem>>, vector<32x324xbf16>,
    %c0_45 = arith.constant 0 : index
    %c109_46 = arith.constant 109 : index
    %58 = vector.load %arg9[%c0_45, %c109_46] : memref<32x580xbf16, #tpu.memory_space<vmem>>, vector<32x324xbf16>
    %59 = arith.extf %58 : vector<32x324xbf16> to vector<32x324xf32>
    %c0_47 = arith.constant 0 : index
    %c0_48 = arith.constant 0 : index
    %60 = vector.load %arg8[%c0_47, %c0_48] : memref<288x324xf32, #tpu.memory_space<vmem>>, vector<32x324xf32>
    tpu.vector_store %arg8[%c0_47, %c0_48], %59 {strides = array<i32>} : memref<288x324xf32, #tpu.memory_space<vmem>>, vector<32x324xf32>,
    %c0_49 = arith.constant 0 : index
    %c110_50 = arith.constant 110 : index
    %61 = vector.load %arg9[%c0_49, %c110_50] : memref<32x580xbf16, #tpu.memory_space<vmem>>, vector<32x324xbf16>
    %62 = arith.extf %61 : vector<32x324xbf16> to vector<32x324xf32>
    %c32_51 = arith.constant 32 : index
    %c0_52 = arith.constant 0 : index
    %63 = vector.load %arg8[%c32_51, %c0_52] : memref<288x324xf32, #tpu.memory_space<vmem>>, vector<32x324xf32>
    tpu.vector_store %arg8[%c32_51, %c0_52], %62 {strides = array<i32>} : memref<288x324xf32, #tpu.memory_space<vmem>>, vector<32x324xf32>,
    %c0_53 = arith.constant 0 : index
    %c111_54 = arith.constant 111 : index
    %64 = vector.load %arg9[%c0_53, %c111_54] : memref<32x580xbf16, #tpu.memory_space<vmem>>, vector<32x324xbf16>
    %65 = arith.extf %64 : vector<32x324xbf16> to vector<32x324xf32>
    %c64 = arith.constant 64 : index
    %c0_55 = arith.constant 0 : index
    %66 = vector.load %arg8[%c64, %c0_55] : memref<288x324xf32, #tpu.memory_space<vmem>>, vector<32x324xf32>
    tpu.vector_store %arg8[%c64, %c0_55], %65 {strides = array<i32>} : memref<288x324xf32, #tpu.memory_space<vmem>>, vector<32x324xf32>,
    %c0_56 = arith.constant 0 : index
    %c127_57 = arith.constant 127 : index
    %67 = vector.load %arg9[%c0_56, %c127_57] : memref<32x580xbf16, #tpu.memory_space<vmem>>, vector<32x324xbf16>
    %68 = arith.extf %67 : vector<32x324xbf16> to vector<32x324xf32>
    %c96 = arith.constant 96 : index
    %c0_58 = arith.constant 0 : index
    %69 = vector.load %arg8[%c96, %c0_58] : memref<288x324xf32, #tpu.memory_space<vmem>>, vector<32x324xf32>
    tpu.vector_store %arg8[%c96, %c0_58], %68 {strides = array<i32>} : memref<288x324xf32, #tpu.memory_space<vmem>>, vector<32x324xf32>,
    %c0_59 = arith.constant 0 : index
    %c128_60 = arith.constant 128 : index
    %70 = vector.load %arg9[%c0_59, %c128_60] : memref<32x580xbf16, #tpu.memory_space<vmem>>, vector<32x324xbf16>
    %71 = arith.extf %70 : vector<32x324xbf16> to vector<32x324xf32>
    %c128_61 = arith.constant 128 : index
    %c0_62 = arith.constant 0 : index
    %72 = vector.load %arg8[%c128_61, %c0_62] : memref<288x324xf32, #tpu.memory_space<vmem>>, vector<32x324xf32>
    tpu.vector_store %arg8[%c128_61, %c0_62], %71 {strides = array<i32>} : memref<288x324xf32, #tpu.memory_space<vmem>>, vector<32x324xf32>,
    %c0_63 = arith.constant 0 : index
    %c129_64 = arith.constant 129 : index
    %73 = vector.load %arg9[%c0_63, %c129_64] : memref<32x580xbf16, #tpu.memory_space<vmem>>, vector<32x324xbf16>
    %74 = arith.extf %73 : vector<32x324xbf16> to vector<32x324xf32>
    %c160 = arith.constant 160 : index
    %c0_65 = arith.constant 0 : index
    %75 = vector.load %arg8[%c160, %c0_65] : memref<288x324xf32, #tpu.memory_space<vmem>>, vector<32x324xf32>
    tpu.vector_store %arg8[%c160, %c0_65], %74 {strides = array<i32>} : memref<288x324xf32, #tpu.memory_space<vmem>>, vector<32x324xf32>,
    %c0_66 = arith.constant 0 : index
    %c145_67 = arith.constant 145 : index
    %76 = vector.load %arg9[%c0_66, %c145_67] : memref<32x580xbf16, #tpu.memory_space<vmem>>, vector<32x324xbf16>
    %77 = arith.extf %76 : vector<32x324xbf16> to vector<32x324xf32>
    %c192 = arith.constant 192 : index
    %c0_68 = arith.constant 0 : index
    %78 = vector.load %arg8[%c192, %c0_68] : memref<288x324xf32, #tpu.memory_space<vmem>>, vector<32x324xf32>
    tpu.vector_store %arg8[%c192, %c0_68], %77 {strides = array<i32>} : memref<288x324xf32, #tpu.memory_space<vmem>>, vector<32x324xf32>,
    %c0_69 = arith.constant 0 : index
    %c146_70 = arith.constant 146 : index
    %79 = vector.load %arg9[%c0_69, %c146_70] : memref<32x580xbf16, #tpu.memory_space<vmem>>, vector<32x324xbf16>
    %80 = arith.extf %79 : vector<32x324xbf16> to vector<32x324xf32>
    %c224 = arith.constant 224 : index
    %c0_71 = arith.constant 0 : index
    %81 = vector.load %arg8[%c224, %c0_71] : memref<288x324xf32, #tpu.memory_space<vmem>>, vector<32x324xf32>
    tpu.vector_store %arg8[%c224, %c0_71], %80 {strides = array<i32>} : memref<288x324xf32, #tpu.memory_space<vmem>>, vector<32x324xf32>,
    %c0_72 = arith.constant 0 : index
    %c147_73 = arith.constant 147 : index
    %82 = vector.load %arg9[%c0_72, %c147_73] : memref<32x580xbf16, #tpu.memory_space<vmem>>, vector<32x324xbf16>
    %83 = arith.extf %82 : vector<32x324xbf16> to vector<32x324xf32>
    %c256 = arith.constant 256 : index
    %c0_74 = arith.constant 0 : index
    %84 = vector.load %arg8[%c256, %c0_74] : memref<288x324xf32, #tpu.memory_space<vmem>>, vector<32x324xf32>
    tpu.vector_store %arg8[%c256, %c0_74], %83 {strides = array<i32>} : memref<288x324xf32, #tpu.memory_space<vmem>>, vector<32x324xf32>,
    %c0_75 = arith.constant 0 : index
    %c0_76 = arith.constant 0 : index
    %85 = vector.load %arg8[%c0_75, %c0_76] : memref<288x324xf32, #tpu.memory_space<vmem>>, vector<288x324xf32>
    %86 = arith.truncf %85 : vector<288x324xf32> to vector<288x324xbf16>
    %c0_77 = arith.constant 0 : index
    %c0_78 = arith.constant 0 : index
    %87 = vector.load %arg4[%c0_77, %c0_78] : memref<16x288xbf16, #tpu.memory_space<vmem>>, vector<16x288xbf16>
    %cst_79 = arith.constant dense<0.000000e+00> : vector<16x324xf32>
    %88 = tpu.matmul %87, %86, %cst_79 {dimension_numbers = #tpu.dot_dimension_numbers<[1], [0], [0], [1], [0, 0, 1, 1], [], []>} : vector<16x288xbf16>, vector<288x324xbf16>, vector<16x324xf32> -> vector<16x324xf32>
    %c0_80 = arith.constant 0 : index
    %c0_81 = arith.constant 0 : index
    %89 = vector.load %arg6[%c0_80, %c0_81] : memref<16x1xf32, #tpu.memory_space<vmem>>, vector<16x1xf32>
    %90 = vector.broadcast %89 : vector<16x1xf32> to vector<16x324xf32>
    %91 = arith.addf %88, %90 : vector<16x324xf32>
    %cst_82 = arith.constant 0.000000e+00 : f32
    %92 = vector.shape_cast %2 : vector<1x324xi1> to vector<1x324xi1>
    %93 = vector.broadcast %92 : vector<1x324xi1> to vector<16x324xi1>
    %94 = vector.broadcast %cst_82 : f32 to vector<16x324xf32>
    %95 = arith.select %93, %91, %94 : vector<16x324xi1>, vector<16x324xf32>
    %c0_83 = arith.constant 0 : index
    %c0_84 = arith.constant 0 : index
    %c0_85 = arith.constant 0 : index
    %96 = vector.load %arg7[%c0_83, %c0_84, %c0_85] : memref<1x16x324xf32, #tpu.memory_space<vmem>>, vector<1x16x324xf32>
    %97 = vector.shape_cast %96 : vector<1x16x324xf32> to vector<16x324xf32>
    %98 = vector.shape_cast %95 : vector<16x324xf32> to vector<1x16x324xf32>
    tpu.vector_store %arg7[%c0_83, %c0_84, %c0_85], %98 {strides = array<i32>} : memref<1x16x324xf32, #tpu.memory_space<vmem>>, vector<1x16x324xf32>,
    return
  }
  func.func @transform_0(%arg0: i32) -> (i32, i32, i32) {
    %c0_i32 = arith.constant 0 : i32
    %c0_i32_0 = arith.constant 0 : i32
    %c0_i32_1 = arith.constant 0 : i32
    return %arg0, %c0_i32, %c0_i32_0 : i32, i32, i32
  }
  func.func @transform_1(%arg0: i32) -> (i32, i32) {
    %c0_i32 = arith.constant 0 : i32
    %c0_i32_0 = arith.constant 0 : i32
    %c0_i32_1 = arith.constant 0 : i32
    return %c0_i32, %c0_i32_0 : i32, i32
  }
  func.func @transform_2(%arg0: i32) -> (i32, i32) {
    %c0_i32 = arith.constant 0 : i32
    %c0_i32_0 = arith.constant 0 : i32
    %c0_i32_1 = arith.constant 0 : i32
    return %c0_i32, %c0_i32_0 : i32, i32
  }
  func.func @transform_3(%arg0: i32) -> (i32, i32) {
    %c0_i32 = arith.constant 0 : i32
    %c0_i32_0 = arith.constant 0 : i32
    %c0_i32_1 = arith.constant 0 : i32
    return %c0_i32, %c0_i32_0 : i32, i32
  }
  func.func @transform_4(%arg0: i32) -> (i32, i32) {
    %c0_i32 = arith.constant 0 : i32
    %c0_i32_0 = arith.constant 0 : i32
    %c0_i32_1 = arith.constant 0 : i32
    return %c0_i32, %c0_i32_0 : i32, i32
  }
  func.func @transform_5(%arg0: i32) -> (i32, i32) {
    %c0_i32 = arith.constant 0 : i32
    %c0_i32_0 = arith.constant 0 : i32
    %c0_i32_1 = arith.constant 0 : i32
    return %c0_i32, %c0_i32_0 : i32, i32
  }
  func.func @transform_6(%arg0: i32) -> (i32, i32, i32) {
    %c0_i32 = arith.constant 0 : i32
    %c0_i32_0 = arith.constant 0 : i32
    %c0_i32_1 = arith.constant 0 : i32
    return %arg0, %c0_i32, %c0_i32_0 : i32, i32, i32
  }
}

</mosaic_0001>

<llo_original>
// kernel: tpu_custom_call.1
$region0: #{tpu_custom_call.1}
  #allocation0 [shape = 'u32[]', space=smem, size = 0x4, offset = 0x4, fixed_abs, tag = 'smem constant byte address 0x4 - core index']
  #allocation1 [shape = 'u32[144,128]{1,0:T(1,128)}', space=vmem, size = 0x12000, scoped, tag = 'internal scratch']
  #allocation2 [shape = 'f32[288,324]{1,0:T(8,128)}', space=vmem, size = 0x6c000, scoped, tag = 'scratch operand']
  #allocation3 [shape = 'bf16[32,580]{1,0:T(16,128)(2,1)}', space=vmem, size = 0xa000, scoped, tag = 'scratch operand']
  %s0 = inlined_call_operand.vmem [shape: bf16[2,4,580], index: 0, kind: input, shape index: {}]
  %s1 = inlined_call_operand.vmem [shape: f32[1,324], index: 1, kind: input, shape index: {}]
  %s2 = inlined_call_operand.hbm [shape: bf16[32,36], index: 2, kind: input, shape index: {}]
  %s3 = inlined_call_operand.vmem [shape: bf16[16,288], index: 3, kind: input, shape index: {}]
  %s4 = inlined_call_operand.vmem [shape: f32[32,1], index: 4, kind: input, shape index: {}]
  %s5 = inlined_call_operand.vmem [shape: f32[16,1], index: 5, kind: input, shape index: {}]
  %s6 = inlined_call_operand.hbm [shape: f32[2,16,324], index: 6, kind: output, shape index: {}]
  %s7 = sld [smem:[#allocation0]]
  $region61: #{tpu_custom_call.1} parent=0
    _
  %s9 = ssub.s32 1, %s7
  %s10 = scalar_select 0, %s9, %s7
  $region1: #{tpu_custom_call.1} parent=0
    #allocation4 [shape = 'u8[8192]{0}', space=vmem, size = 0x2000, scoped, tag = 'input window, operand 2, single buffered']
    #allocation5 [shape = 's32[2]{0}', space=sflag, size = 0x8, scoped, tag = 'scoped memory for tpu_custom_call.1']
    #allocation6 [shape = 's32[2]{0}', space=sflag, size = 0x8, scoped, tag = 'scoped memory for tpu_custom_call.1']
    #allocation7 [shape = 'u8[49152]{0}', space=vmem, size = 0xc000, scoped, tag = 'output window, operand 0']
    %11 = vsyncpa [#allocation5], 0
    %12 = vsyncpa [#allocation6], 0
    %s13 = scalar_lea.sflag [#allocation6], 1
    %14 = vsyncpa %s13, 0
    loop: start=0, step=1, limit=4
    $region2: #{tpu_custom_call.1} parent=1 // loop_pre_header
      _
    $region3: #{tpu_custom_call.1} parent=1 // loop_header
      %s16 = sphi 0, %s20
      %p17 = scmp.ge.s32.totalorder %s16, 4
      %s26 = sphi 0, %s28
      %s29 = sphi 0, %s26
      %s30 = sphi 0, %s29
      %s46 = sphi 0, %s30
      %s50 = sphi 0, %s50
      %s52 = sphi 0, %s50
      %s53 = sphi 0, %s52
      %s67 = sphi 0, %s53
      %s71 = sphi 0, %s71
      %s73 = sphi 0, %s71
      %s74 = sphi 0, %s73
      %s88 = sphi 0, %s74
      %s92 = sphi 0, %s92
      %s94 = sphi 0, %s92
      %s95 = sphi 0, %s94
      %s109 = sphi 0, %s95
      %s113 = sphi 0, %s113
      %s115 = sphi 0, %s113
      %s116 = sphi 0, %s115
      %s130 = sphi 0, %s116
      %s134 = sphi 0, %s134
      %s136 = sphi 0, %s134
      %s137 = sphi 0, %s136
      %s151 = sphi 0, %s137
      %s157 = sphi 0, %s159
      %s160 = sphi 0, %s157
      %s161 = sphi 0, %s160
      %s177 = sphi 0, %s161
    $region4: #{tpu_custom_call.1} parent=1 // loop_header_branch
      %19 = sbr.rel (%p17) target = $region8
    $region5: #{tpu_custom_call.1} parent=1 // loop_body
      %s21 = ssub.s32 %s16, 1
      %s22 = ssub.s32 %s16, 2
      %s23 = sadd.s32 %s16, 1
      %s24 = ssub.s32 %s16, %s23
      %p25 = scmp.eq.s32.totalorder %s24, 0
      %s27 = sadd.s32 %s26, 1
      %s28 = scalar_select %p25, %s26, %s27
      %p31 = pneg %p25
      %p32 = scmp.eq.s32.totalorder %s16, 1
      %p33 = por %p31, %p32
      %p34 = scmp.ne.s32.totalorder %s26, %s29
      %p35 = scmp.eq.s32.totalorder %s16, 0
      %p36 = por %p34, %p35
      %p37 = scmp.ne.s32.totalorder %s26, %s29
      %p38 = scmp.eq.s32.totalorder %s21, 1
      %p39 = por %p37, %p38
      %p40 = scmp.ne.s32.totalorder %s29, %s30
      %p41 = scmp.eq.s32.totalorder %s21, 0
      %p42 = por %p40, %p41
      %p43 = scmp.ne.s32.totalorder %s29, %s30
      %p44 = scmp.eq.s32.totalorder %s22, 1
      %p45 = por %p43, %p44
      %p47 = scmp.ne.s32.totalorder %s30, %s46
      %p48 = scmp.eq.s32.totalorder %s22, 0
      %p49 = por %p47, %p48
      %s51 = sadd.s32 %s50, 1
      %p54 = scmp.eq.s32.totalorder %s16, 1
      %p55 = scmp.ne.s32.totalorder %s50, %s52
      %p56 = scmp.eq.s32.totalorder %s16, 0
      %p57 = por %p55, %p56
      %p58 = scmp.ne.s32.totalorder %s50, %s52
      %p59 = scmp.eq.s32.totalorder %s21, 1
      %p60 = por %p58, %p59
      %p61 = scmp.ne.s32.totalorder %s52, %s53
      %p62 = scmp.eq.s32.totalorder %s21, 0
      %p63 = por %p61, %p62
      %p64 = scmp.ne.s32.totalorder %s52, %s53
      %p65 = scmp.eq.s32.totalorder %s22, 1
      %p66 = por %p64, %p65
      %p68 = scmp.ne.s32.totalorder %s53, %s67
      %p69 = scmp.eq.s32.totalorder %s22, 0
      %p70 = por %p68, %p69
      %s72 = sadd.s32 %s71, 1
      %p75 = scmp.eq.s32.totalorder %s16, 1
      %p76 = scmp.ne.s32.totalorder %s71, %s73
      %p77 = scmp.eq.s32.totalorder %s16, 0
      %p78 = por %p76, %p77
      %p79 = scmp.ne.s32.totalorder %s71, %s73
      %p80 = scmp.eq.s32.totalorder %s21, 1
      %p81 = por %p79, %p80
      %p82 = scmp.ne.s32.totalorder %s73, %s74
      %p83 = scmp.eq.s32.totalorder %s21, 0
      %p84 = por %p82, %p83
      %p85 = scmp.ne.s32.totalorder %s73, %s74
      %p86 = scmp.eq.s32.totalorder %s22, 1
      %p87 = por %p85, %p86
      %p89 = scmp.ne.s32.totalorder %s74, %s88
      %p90 = scmp.eq.s32.totalorder %s22, 0
      %p91 = por %p89, %p90
      %s93 = sadd.s32 %s92, 1
      %p96 = scmp.eq.s32.totalorder %s16, 1
      %p97 = scmp.ne.s32.totalorder %s92, %s94
      %p98 = scmp.eq.s32.totalorder %s16, 0
      %p99 = por %p97, %p98
      %p100 = scmp.ne.s32.totalorder %s92, %s94
      %p101 = scmp.eq.s32.totalorder %s21, 1
      %p102 = por %p100, %p101
      %p103 = scmp.ne.s32.totalorder %s94, %s95
      %p104 = scmp.eq.s32.totalorder %s21, 0
      %p105 = por %p103, %p104
      %p106 = scmp.ne.s32.totalorder %s94, %s95
      %p107 = scmp.eq.s32.totalorder %s22, 1
      %p108 = por %p106, %p107
      %p110 = scmp.ne.s32.totalorder %s95, %s109
      %p111 = scmp.eq.s32.totalorder %s22, 0
      %p112 = por %p110, %p111
      %s114 = sadd.s32 %s113, 1
      %p117 = scmp.eq.s32.totalorder %s16, 1
      %p118 = scmp.ne.s32.totalorder %s113, %s115
      %p119 = scmp.eq.s32.totalorder %s16, 0
      %p120 = por %p118, %p119
      %p121 = scmp.ne.s32.totalorder %s113, %s115
      %p122 = scmp.eq.s32.totalorder %s21, 1
      %p123 = por %p121, %p122
      %p124 = scmp.ne.s32.totalorder %s115, %s116
      %p125 = scmp.eq.s32.totalorder %s21, 0
      %p126 = por %p124, %p125
      %p127 = scmp.ne.s32.totalorder %s115, %s116
      %p128 = scmp.eq.s32.totalorder %s22, 1
      %p129 = por %p127, %p128
      %p131 = scmp.ne.s32.totalorder %s116, %s130
      %p132 = scmp.eq.s32.totalorder %s22, 0
      %p133 = por %p131, %p132
      %s135 = sadd.s32 %s134, 1
      %p138 = scmp.eq.s32.totalorder %s16, 1
      %p139 = scmp.ne.s32.totalorder %s134, %s136
      %p140 = scmp.eq.s32.totalorder %s16, 0
      %p141 = por %p139, %p140
      %p142 = scmp.ne.s32.totalorder %s134, %s136
      %p143 = scmp.eq.s32.totalorder %s21, 1
      %p144 = por %p142, %p143
      %p145 = scmp.ne.s32.totalorder %s136, %s137
      %p146 = scmp.eq.s32.totalorder %s21, 0
      %p147 = por %p145, %p146
      %p148 = scmp.ne.s32.totalorder %s136, %s137
      %p149 = scmp.eq.s32.totalorder %s22, 1
      %p150 = por %p148, %p149
      %p152 = scmp.ne.s32.totalorder %s137, %s151
      %p153 = scmp.eq.s32.totalorder %s22, 0
      %p154 = por %p152, %p153
      %s155 = ssub.s32 %s16, %s23
      %p156 = scmp.eq.s32.totalorder %s155, 0
      %s158 = sadd.s32 %s157, 1
      %s159 = scalar_select %p156, %s157, %s158
      %p162 = pneg %p156
      %p163 = scmp.eq.s32.totalorder %s16, 1
      %p164 = por %p162, %p163
      %p165 = scmp.ne.s32.totalorder %s157, %s160
      %p166 = scmp.eq.s32.totalorder %s16, 0
      %p167 = por %p165, %p166
      %p168 = scmp.ne.s32.totalorder %s157, %s160
      %p169 = scmp.eq.s32.totalorder %s21, 1
      %p170 = por %p168, %p169
      %p171 = scmp.ne.s32.totalorder %s160, %s161
      %p172 = scmp.eq.s32.totalorder %s21, 0
      %p173 = por %p171, %p172
      %p174 = scmp.ne.s32.totalorder %s160, %s161
      %p175 = scmp.eq.s32.totalorder %s22, 1
      %p176 = por %p174, %p175
      %p178 = scmp.ne.s32.totalorder %s161, %s177
      %p179 = scmp.eq.s32.totalorder %s22, 0
      %p180 = por %p178, %p179
      %p181 = scmp.le.s32.totalorder 1, %s16
      %p182 = scmp.lt.s32.totalorder %s16, 3
      %p183 = pnand %p181, %p182
      %p184 = pneg %p183
      // Predicated region
      $region9: #{tpu_custom_call.1} parent=5 // pred_check
        _
      $region10: #{tpu_custom_call.1} parent=5 // pred_check_branch
        %186 = sbr.rel (%p183) target = $region12
      $region11: #{tpu_custom_call.1} parent=5 // pred_region
        %s187 = ssub.s32 %s16, 1
        // Predicated region
        $region13: #{tpu_custom_call.1} parent=11 // pred_check
          %p188 = pneg %p63
        $region14: #{tpu_custom_call.1} parent=11 // pred_check_branch
          %190 = sbr.rel (%p188) target = $region16
        $region15: #{tpu_custom_call.1} parent=11 // pred_region
          _
        $region16: #{tpu_custom_call.1} parent=11 // pred_fallthru
          _
        // Predicated region
        $region17: #{tpu_custom_call.1} parent=11 // pred_check
          %p191 = pneg %p84
        $region18: #{tpu_custom_call.1} parent=11 // pred_check_branch
          %193 = sbr.rel (%p191) target = $region20
        $region19: #{tpu_custom_call.1} parent=11 // pred_region
          %s195 = ssub.s32 256, 256
          %196 = vsyncadd [#allocation5], %s195
          %s197 = sshll.u32 [#allocation4], 4
          %s198 = int_to_ptr.vmem [resolvable:$true] %s197
          %203 = dma.hbm_to_vmem [thread:$0]  %s2, 256, %s198, [#allocation5], 64, 64, 4
        $region20: #{tpu_custom_call.1} parent=11 // pred_fallthru
          _
        // Predicated region
        $region21: #{tpu_custom_call.1} parent=11 // pred_check
          %p204 = pneg %p105
        $region22: #{tpu_custom_call.1} parent=11 // pred_check_branch
          %206 = sbr.rel (%p204) target = $region24
        $region23: #{tpu_custom_call.1} parent=11 // pred_region
          _
        $region24: #{tpu_custom_call.1} parent=11 // pred_fallthru
          _
        // Predicated region
        $region25: #{tpu_custom_call.1} parent=11 // pred_check
          %p207 = pneg %p126
        $region26: #{tpu_custom_call.1} parent=11 // pred_check_branch
          %209 = sbr.rel (%p207) target = $region28
        $region27: #{tpu_custom_call.1} parent=11 // pred_region
          _
        $region28: #{tpu_custom_call.1} parent=11 // pred_fallthru
          _
        // Predicated region
        $region29: #{tpu_custom_call.1} parent=11 // pred_check
          %p210 = pneg %p147
        $region30: #{tpu_custom_call.1} parent=11 // pred_check_branch
          %212 = sbr.rel (%p210) target = $region32
        $region31: #{tpu_custom_call.1} parent=11 // pred_region
          _
        $region32: #{tpu_custom_call.1} parent=11 // pred_fallthru
          _
      $region12: #{tpu_custom_call.1} parent=5 // pred_fallthru
        _
      %p213 = scmp.lt.s32.totalorder %s16, 2
      // Predicated region
      $region33: #{tpu_custom_call.1} parent=5 // pred_check
        %p214 = pneg %p213
      $region34: #{tpu_custom_call.1} parent=5 // pred_check_branch
        %216 = sbr.rel (%p214) target = $region36
      $region35: #{tpu_custom_call.1} parent=5 // pred_region
        // Predicated region
        $region37: #{tpu_custom_call.1} parent=35 // pred_check
          %p217 = pneg %p36
        $region38: #{tpu_custom_call.1} parent=35 // pred_check_branch
          %219 = sbr.rel (%p217) target = $region40
        $region39: #{tpu_custom_call.1} parent=35 // pred_region
          %p220 = scmp.lt.s32.totalorder %s16, 1
          %s221 = scalar_select %p220, %s16, 1
          %s222 = smul.addr %s221, 5
          %s223 = smul.addr %s222, 2
          %s224 = scalar_lea.vmem %s0, %s223
        $region40: #{tpu_custom_call.1} parent=35 // pred_fallthru
          _
      $region36: #{tpu_custom_call.1} parent=5 // pred_fallthru
        _
      %p225 = scmp.le.s32.totalorder 1, %s16
      %p226 = scmp.lt.s32.totalorder %s16, 3
      %p227 = pnand %p225, %p226
      %p228 = pneg %p227
      // Predicated region
      $region41: #{tpu_custom_call.1} parent=5 // pred_check
        _
      $region42: #{tpu_custom_call.1} parent=5 // pred_check_branch
        %230 = sbr.rel (%p227) target = $region44
      $region43: #{tpu_custom_call.1} parent=5 // pred_region
        %s231 = ssub.s32 %s16, 1
        // Predicated region
        $region45: #{tpu_custom_call.1} parent=43 // pred_check
          %p232 = pneg %p84
        $region46: #{tpu_custom_call.1} parent=43 // pred_check_branch
          %234 = sbr.rel (%p232) target = $region48
        $region47: #{tpu_custom_call.1} parent=43 // pred_region
          %235 = dma.done [#allocation5], 256
        $region48: #{tpu_custom_call.1} parent=43 // pred_fallthru
          _
        %p236 = scmp.lt.s32.totalorder %s21, 1
        %s237 = scalar_select %p236, %s21, 1
        %s238 = smul.addr %s237, 5
        %s239 = smul.addr %s238, 2
        %s240 = scalar_lea.vmem %s0, %s239
        %p241 = pneg %p42
        %p242 = pneg %p39
        %p243 = pneg %p63
        %p244 = pneg %p60
        %p245 = pneg %p84
        %p246 = pneg %p81
        %p247 = pneg %p105
        %p248 = pneg %p102
        %p249 = pneg %p126
        %p250 = pneg %p123
        %p251 = pneg %p147
        %p252 = pneg %p144
        %p253 = pneg %p173
        %p254 = pneg %p170
        %s255 = sand.u32 %s160, 1
        %s256 = scalar_lea.sflag [#allocation6], %s255
        %s257 = sand.u32 %s160, 1
        %s258 = smul.addr %s257, 48
        %s259 = scalar_lea.vmem [#allocation7], %s258
        %p260 = scmp.lt.s32.totalorder %s21, 1
        %s261 = scalar_select %p260, %s21, 1
        %s262 = smul.addr %s261, 5
        %s263 = smul.addr %s262, 2
        %s264 = scalar_lea.vmem %s0, %s263
        %v266 = vld [vmem:[%s1] sm:$0x7]
        %vm267 = vcmp.ne.f32.partialorder %v266, 0.0
        %268 = vst [vmem:[#allocation3] sm:$0xff] 0
        %269 = vst [vmem:[#allocation3 + $0x28] sm:$0xff] 0
        %vm270 = vcmask 1048096
        %271 = vst.msk [vmem:[#allocation3 + $0x18] sm:$0xff] %vm270, 0
        %vm272 = vcmask 556032
        %273 = vst.msk [vmem:[#allocation3 + $0x20] sm:$0xff] %vm272, 0
        %274 = vst.msk [vmem:[#allocation3 + $0x40] sm:$0xff] %vm270, 0
        %275 = vst.msk [vmem:[#allocation3 + $0x48] sm:$0xff] %vm272, 0
        %v276 = vld [vmem:[%s264] sm:$0xff]
        %v277 = vunpack.c.l.bf16 %v276
        %v278 = vunpack.c.h.bf16 %v276
        %v281 = vcombine.high %v277, %v277
        %v282 = vcombine.high %v278, %v278
        %283 = vrot.lane.b32.xlu0 %v277, 19
        %v284 = vpop.permute.xlu0 %283
        %285 = vrot.lane.b32.xlu0 %v281, 19
        %v286 = vpop.permute.xlu0 %285
        %287 = vrot.lane.b32.xlu0 %v278, 19
        %v288 = vpop.permute.xlu0 %287
        %289 = vrot.lane.b32.xlu0 %v282, 19
        %v290 = vpop.permute.xlu0 %289
        %vm291 = vcmask 154624
        %v292 = vsel %vm291, %v284, %v286
        %v293 = vsel %vm291, %v286, %v288
        %v294 = vsel %vm291, %v288, %v290
        %298 = vst [vmem:[#allocation2] sm:$0xf] %v292
        %299 = vst [vmem:[#allocation2 + $0x8] sm:$0xf] %v293
        %vm300 = vcmask 551936
        %301 = vst.msk [vmem:[#allocation2 + $0x10] sm:$0xf] %vm300, %v294
        %v302 = vld [vmem:[%s264] sm:$0xff]
        %v303 = vunpack.c.l.bf16 %v302
        %v304 = vunpack.c.h.bf16 %v302
        %v307 = vcombine.low %v303, %v303
        %v308 = vcombine.low %v304, %v304
        %309 = vrot.lane.b32.xlu0 %v307, 18
        %v310 = vpop.permute.xlu0 %309
        %311 = vrot.lane.b32.xlu0 %v303, 18
        %v312 = vpop.permute.xlu0 %311
        %313 = vrot.lane.b32.xlu0 %v308, 18
        %v314 = vpop.permute.xlu0 %313
        %315 = vrot.lane.b32.xlu0 %v304, 18
        %v316 = vpop.permute.xlu0 %315
        %vm317 = vcmask 146432
        %v318 = vsel %vm317, %v310, %v312
        %v319 = vsel %vm317, %v312, %v314
        %v320 = vsel %vm317, %v314, %v316
        %324 = vst [vmem:[#allocation2] sm:$0xf0] %v318
        %325 = vst [vmem:[#allocation2 + $0x8] sm:$0xf0] %v319
        %vm326 = vcmask 556036
        %327 = vst.msk [vmem:[#allocation2 + $0x10] sm:$0xf0] %vm326, %v320
        %v328 = vld [vmem:[%s264] sm:$0xff]
        %v329 = vunpack.c.l.bf16 %v328
        %v330 = vunpack.c.h.bf16 %v328
        %v333 = vcombine.high %v329, %v329
        %v334 = vcombine.high %v330, %v330
        %335 = vrot.lane.b32.xlu0 %v329, 17
        %v336 = vpop.permute.xlu0 %335
        %337 = vrot.lane.b32.xlu0 %v333, 17
        %v338 = vpop.permute.xlu0 %337
        %339 = vrot.lane.b32.xlu0 %v330, 17
        %v340 = vpop.permute.xlu0 %339
        %341 = vrot.lane.b32.xlu0 %v334, 17
        %v342 = vpop.permute.xlu0 %341
        %vm343 = vcmask 138240
        %v344 = vsel %vm343, %v336, %v338
        %v345 = vsel %vm343, %v338, %v340
        %v346 = vsel %vm343, %v340, %v342
        %350 = vst [vmem:[#allocation2 + $0x18] sm:$0xf] %v344
        %351 = vst [vmem:[#allocation2 + $0x20] sm:$0xf] %v345
        %352 = vst.msk [vmem:[#allocation2 + $0x28] sm:$0xf] %vm300, %v346
        %v353 = vld [vmem:[%s264] sm:$0xff]
        %v354 = vunpack.c.l.bf16 %v353
        %v355 = vunpack.c.h.bf16 %v353
        %v358 = vcombine.low %v354, %v354
        %v359 = vcombine.low %v355, %v355
        %360 = vrot.lane.b32.xlu0 %v358, 1
        %v361 = vpop.permute.xlu0 %360
        %362 = vrot.lane.b32.xlu0 %v354, 1
        %v363 = vpop.permute.xlu0 %362
        %364 = vrot.lane.b32.xlu0 %v359, 1
        %v365 = vpop.permute.xlu0 %364
        %366 = vrot.lane.b32.xlu0 %v355, 1
        %v367 = vpop.permute.xlu0 %366
        %vm368 = vcmask 7168
        %v369 = vsel %vm368, %v361, %v363
        %v370 = vsel %vm368, %v363, %v365
        %v371 = vsel %vm368, %v365, %v367
        %375 = vst [vmem:[#allocation2 + $0x18] sm:$0xf0] %v369
        %376 = vst [vmem:[#allocation2 + $0x20] sm:$0xf0] %v370
        %377 = vst.msk [vmem:[#allocation2 + $0x28] sm:$0xf0] %vm326, %v371
        %v378 = vld [vmem:[%s264 + $0x2] sm:$0x3f]
        %v379 = vunpack.c.l.bf16 %v378
        %v380 = vunpack.c.h.bf16 %v378
        %v382 = vcombine.high %v379, %v379
        %384 = vst [vmem:[#allocation2 + $0x30] sm:$0xf] %v379
        %385 = vst [vmem:[#allocation2 + $0x38] sm:$0xf] %v382
        %386 = vst.msk [vmem:[#allocation2 + $0x40] sm:$0xf] %vm300, %v380
        %v387 = vld [vmem:[%s264 + $0x2] sm:$0x3f]
        %v388 = vunpack.c.l.bf16 %v387
        %v389 = vunpack.c.h.bf16 %v387
        %v392 = vcombine.low %v388, %v388
        %v393 = vcombine.low %v389, %v389
        %394 = vrot.lane.b32.xlu0 %v392, 127
        %v395 = vpop.permute.xlu0 %394
        %396 = vrot.lane.b32.xlu0 %v388, 127
        %v397 = vpop.permute.xlu0 %396
        %398 = vrot.lane.b32.xlu0 %v393, 127
        %v399 = vpop.permute.xlu0 %398
        %vm400 = vcmask 1039360
        %v401 = vsel %vm400, %v395, %v397
        %v402 = vsel %vm400, %v397, %v399
        %406 = vst [vmem:[#allocation2 + $0x30] sm:$0xf0] %v401
        %407 = vst [vmem:[#allocation2 + $0x38] sm:$0xf0] %v402
        %408 = vst.msk [vmem:[#allocation2 + $0x40] sm:$0xf0] %vm326, %v399
        %v409 = vld [vmem:[%s264 + $0x2] sm:$0x3f]
        %v410 = vunpack.c.l.bf16 %v409
        %v411 = vunpack.c.h.bf16 %v409
        %v414 = vcombine.high %v410, %v410
        %415 = vrot.lane.b32.xlu0 %v410, 111
        %v416 = vpop.permute.xlu0 %415
        %417 = vrot.lane.b32.xlu0 %v414, 111
        %v418 = vpop.permute.xlu0 %417
        %419 = vrot.lane.b32.xlu0 %v411, 111
        %v420 = vpop.permute.xlu0 %419
        %vm421 = vcmask 908288
        %v422 = vsel %vm421, %v416, %v418
        %v423 = vsel %vm421, %v418, %v420
        %427 = vst [vmem:[#allocation2 + $0x48] sm:$0xf] %v422
        %428 = vst [vmem:[#allocation2 + $0x50] sm:$0xf] %v423
        %429 = vst.msk [vmem:[#allocation2 + $0x58] sm:$0xf] %vm300, %v420
        %v430 = vld [vmem:[%s264 + $0x2] sm:$0x3f]
        %v431 = vunpack.c.l.bf16 %v430
        %v432 = vunpack.c.h.bf16 %v430
        %v435 = vcombine.low %v431, %v431
        %v436 = vcombine.low %v432, %v432
        %437 = vrot.lane.b32.xlu0 %v435, 110
        %v438 = vpop.permute.xlu0 %437
        %439 = vrot.lane.b32.xlu0 %v431, 110
        %v440 = vpop.permute.xlu0 %439
        %441 = vrot.lane.b32.xlu0 %v436, 110
        %v442 = vpop.permute.xlu0 %441
        %vm443 = vcmask 900096
        %v444 = vsel %vm443, %v438, %v440
        %v445 = vsel %vm443, %v440, %v442
        %449 = vst [vmem:[#allocation2 + $0x48] sm:$0xf0] %v444
        %450 = vst [vmem:[#allocation2 + $0x50] sm:$0xf0] %v445
        %451 = vst.msk [vmem:[#allocation2 + $0x58] sm:$0xf0] %vm326, %v442
        %v452 = vld [vmem:[%s264 + $0x2] sm:$0x3f]
        %v453 = vunpack.c.l.bf16 %v452
        %v454 = vunpack.c.h.bf16 %v452
        %v457 = vcombine.high %v453, %v453
        %458 = vrot.lane.b32.xlu0 %v453, 109
        %v459 = vpop.permute.xlu0 %458
        %460 = vrot.lane.b32.xlu0 %v457, 109
        %v461 = vpop.permute.xlu0 %460
        %462 = vrot.lane.b32.xlu0 %v454, 109
        %v463 = vpop.permute.xlu0 %462
        %vm464 = vcmask 891904
        %v465 = vsel %vm464, %v459, %v461
        %v466 = vsel %vm464, %v461, %v463
        %470 = vst [vmem:[#allocation2 + $0x60] sm:$0xf] %v465
        %471 = vst [vmem:[#allocation2 + $0x68] sm:$0xf] %v466
        %472 = vst.msk [vmem:[#allocation2 + $0x70] sm:$0xf] %vm300, %v463
        %v473 = vld [vmem:[#allocation2] sm:$0xff]
        %v474 = vld [vmem:[#allocation2 + $0x8] sm:$0xff]
        %v475 = vld [vmem:[#allocation2 + $0x10] sm:$0xff]
        %v476 = vld [vmem:[#allocation2 + $0x18] sm:$0xff]
        %v477 = vld [vmem:[#allocation2 + $0x20] sm:$0xff]
        %v478 = vld [vmem:[#allocation2 + $0x28] sm:$0xff]
        %v479 = vld [vmem:[#allocation2 + $0x30] sm:$0xff]
        %v480 = vld [vmem:[#allocation2 + $0x38] sm:$0xff]
        %v481 = vld [vmem:[#allocation2 + $0x40] sm:$0xff]
        %v482 = vld [vmem:[#allocation2 + $0x48] sm:$0xff]
        %v483 = vld [vmem:[#allocation2 + $0x50] sm:$0xff]
        %v484 = vld [vmem:[#allocation2 + $0x58] sm:$0xff]
        %v485 = vld [vmem:[#allocation2 + $0x60] sm:$0xf]
        %v486 = vld [vmem:[#allocation2 + $0x68] sm:$0xf]
        %v487 = vld [vmem:[#allocation2 + $0x70] sm:$0xf]
        %v488 = vpack.c.bf16 %v476, %v473
        %v489 = vpack.c.bf16 %v477, %v474
        %v490 = vpack.c.bf16 %v478, %v475
        %v491 = vpack.c.bf16 %v482, %v479
        %v492 = vpack.c.bf16 %v483, %v480
        %v493 = vpack.c.bf16 %v484, %v481
        %v494 = vpack.c.bf16 %v485, %v485
        %v495 = vpack.c.bf16 %v486, %v486
        %v496 = vpack.c.bf16 %v487, %v487
        %v497 = vld [vmem:[#allocation4] sm:$0xf]
        %v498 = vld [vmem:[#allocation4 + $0x4] sm:$0xf]
        %v499 = vld [vmem:[#allocation4 + $0x8] sm:$0xf]
        %v500 = vld [vmem:[#allocation4 + $0xc] sm:$0xf]
        %v501 = vld [vmem:[%s4] sm:$0xff]
        %v502 = vld [vmem:[%s4 + $0x8] sm:$0xff]
        %v503 = vld [vmem:[%s4 + $0x10] sm:$0xff]
        %v504 = vld [vmem:[%s4 + $0x18] sm:$0xff]
        %506 = vset.pattern.permute.xlu0 0
        %507 = vperm.xlu0 %506, %v501
        %v508 = vpop.permute.xlu0 %507
        %511 = vset.pattern.permute.xlu0 0
        %512 = vperm.xlu0 %511, %v502
        %v513 = vpop.permute.xlu0 %512
        %516 = vset.pattern.permute.xlu0 0
        %517 = vperm.xlu0 %516, %v503
        %v518 = vpop.permute.xlu0 %517
        %521 = vset.pattern.permute.xlu0 0
        %522 = vperm.xlu0 %521, %v504
        %v523 = vpop.permute.xlu0 %522
        %v529 = vunpack.c.l.b16 %v497
        %v530 = vunpack.c.l.b16 %v498
        %v531 = vunpack.c.l.b16 %v499
        %v532 = vunpack.c.l.b16 %v500
        %v533 = vpack.c.b16 %v530, %v529
        %v534 = vpack.c.b16 %v532, %v531
        %vm535 = vcmask 293888
        %v537 = vsel %vm535, %v533, 0
        %v540 = vsel %vm535, %v534, 0
        %vm542 = vcmask 1041408
        %v544 = vsel %vm542, %v494, 0
        %v547 = vsel %vm542, %v495, 0
        %v550 = vsel %vm542, %v496, 0
        %552 = vmatprep.subr.bf16.mxu0 %v489
        %553 = vmatpush1.bf16.msra.mxu0 %v488
        %554 = vmatprep.subr.bf16.mxu0 %v492
        %555 = vmatpush1.bf16.msra.mxu0 %v491
        %556 = vmatprep.subr.bf16.mxu0 %v547
        %557 = vmatpush1.bf16.msra.mxu0 %v544
        %558 = vmatprep.subr.bf16.mxu0 0
        %559 = vmatpush1.bf16.msra.mxu0 0
        %560 = vmatprep.subr.bf16.mxu0 0
        %561 = vmatpush1.bf16.msra.mxu0 0
        %562 = vmatprep.subr.bf16.mxu0 0
        %563 = vmatpush1.bf16.msra.mxu0 0
        %564 = vmatprep.subr.bf16.mxu0 0
        %565 = vmatpush1.bf16.msra.mxu0 0
        %566 = vmatprep.subr.bf16.mxu0 0
        %567 = vmatpush1.bf16.msra.mxu0 0
        %568 = vmatprep.subr.bf16.mxu0 0
        %569 = vmatpush1.bf16.msra.mxu0 0
        %570 = vmatprep.subr.bf16.mxu0 0
        %571 = vmatpush1.bf16.msra.mxu0 0
        %572 = vmatprep.subr.bf16.mxu0 0
        %573 = vmatpush1.bf16.msra.mxu0 0
        %574 = vmatprep.subr.bf16.mxu0 0
        %575 = vmatpush1.bf16.msra.mxu0 0
        %576 = vmatprep.subr.bf16.mxu0 0
        %577 = vmatpush1.bf16.msra.mxu0 0
        %578 = vmatprep.subr.bf16.mxu0 0
        %579 = vmatpush1.bf16.msra.mxu0 0
        %580 = vmatprep.subr.bf16.mxu0 0
        %581 = vmatpush1.bf16.msra.mxu0 0
        %582 = vmatprep.subr.bf16.mxu0 0
        %583 = vmatpush1.bf16.msra.mxu0 0
        %584 = vmatprep.mubr.bf16.mxu0 0
        %585 = vmatmul.mubr.bf16.gmra.mrb[0].mxu0 %v537
        %v586 = vpop.f32.mrb[0].mxu0
        %v587 = vadd.f32 %v508, %v586
        %v588 = vpop.f32.mrb[0].mxu0
        %v589 = vadd.f32 %v508, %v588
        %v590 = vpop.f32.mrb[0].mxu0
        %v591 = vadd.f32 %v513, %v590
        %v592 = vpop.f32.mrb[0].mxu0
        %v593 = vadd.f32 %v513, %v592
        %594 = vmatprep.mubr.bf16.mxu0 0
        %595 = vmatmul.mubr.bf16.gmra.mrb[0].mxu0 %v540
        %v596 = vpop.f32.mrb[0].mxu0
        %v597 = vadd.f32 %v518, %v596
        %v598 = vpop.f32.mrb[0].mxu0
        %v599 = vadd.f32 %v518, %v598
        %v600 = vpop.f32.mrb[0].mxu0
        %v601 = vadd.f32 %v523, %v600
        %v602 = vpop.f32.mrb[0].mxu0
        %v603 = vadd.f32 %v523, %v602
        %604 = vdwg.mxu0
        %605 = vmatprep.subr.bf16.mxu0 0
        %606 = vmatpush1.bf16.msra.mxu0 %v490
        %607 = vmatprep.subr.bf16.mxu0 0
        %608 = vmatpush1.bf16.msra.mxu0 %v493
        %609 = vmatprep.subr.bf16.mxu0 0
        %610 = vmatpush1.bf16.msra.mxu0 %v550
        %611 = vmatprep.subr.bf16.mxu0 0
        %612 = vmatpush1.bf16.msra.mxu0 0
        %613 = vmatprep.subr.bf16.mxu0 0
        %614 = vmatpush1.bf16.msra.mxu0 0
        %615 = vmatprep.subr.bf16.mxu0 0
        %616 = vmatpush1.bf16.msra.mxu0 0
        %617 = vmatprep.subr.bf16.mxu0 0
        %618 = vmatpush1.bf16.msra.mxu0 0
        %619 = vmatprep.subr.bf16.mxu0 0
        %620 = vmatpush1.bf16.msra.mxu0 0
        %621 = vmatprep.subr.bf16.mxu0 0
        %622 = vmatpush1.bf16.msra.mxu0 0
        %623 = vmatprep.subr.bf16.mxu0 0
        %624 = vmatpush1.bf16.msra.mxu0 0
        %625 = vmatprep.subr.bf16.mxu0 0
        %626 = vmatpush1.bf16.msra.mxu0 0
        %627 = vmatprep.subr.bf16.mxu0 0
        %628 = vmatpush1.bf16.msra.mxu0 0
        %629 = vmatprep.subr.bf16.mxu0 0
        %630 = vmatpush1.bf16.msra.mxu0 0
        %631 = vmatprep.subr.bf16.mxu0 0
        %632 = vmatpush1.bf16.msra.mxu0 0
        %633 = vmatprep.subr.bf16.mxu0 0
        %634 = vmatpush1.bf16.msra.mxu0 0
        %635 = vmatprep.subr.bf16.mxu0 0
        %636 = vmatpush1.bf16.msra.mxu0 0
        %637 = vmatprep.mubr.bf16.mxu0 0
        %638 = vmatmul.mubr.bf16.gmra.mrb[0].mxu0 %v537
        %v639 = vpop.f32.mrb[0].mxu0
        %v640 = vadd.f32 %v508, %v639
        %v641 = vpop.f32.mrb[0].mxu0
        %v642 = vpop.f32.mrb[0].mxu0
        %v643 = vadd.f32 %v513, %v642
        %v644 = vpop.f32.mrb[0].mxu0
        %645 = vmatprep.mubr.bf16.mxu0 0
        %646 = vmatmul.mubr.bf16.gmra.mrb[0].mxu0 %v540
        %v647 = vpop.f32.mrb[0].mxu0
        %v648 = vadd.f32 %v518, %v647
        %v649 = vpop.f32.mrb[0].mxu0
        %v650 = vpop.f32.mrb[0].mxu0
        %v651 = vadd.f32 %v523, %v650
        %v652 = vpop.f32.mrb[0].mxu0
        %653 = vdwg.mxu0
        %v654 = vmax.f32 %v587, 0.0
        %v655 = vmax.f32 %v589, 0.0
        %v656 = vmax.f32 %v640, 0.0
        %v657 = vmax.f32 %v591, 0.0
        %v658 = vmax.f32 %v593, 0.0
        %v659 = vmax.f32 %v643, 0.0
        %v660 = vmax.f32 %v597, 0.0
        %v661 = vmax.f32 %v599, 0.0
        %v662 = vmax.f32 %v648, 0.0
        %v663 = vmax.f32 %v601, 0.0
        %v664 = vmax.f32 %v603, 0.0
        %v665 = vmax.f32 %v651, 0.0
        %v666 = vsel %vm267, 1, 0
        %v667 = vlaneseq
        %v668 = vshrl.u32 %v667, 7
        %v669 = vsub.s32 0, %v668
        %v670 = vrot.slane %v666, %v669
        %v671 = vlaneseq
        %v672 = vshrl.u32 %v671, 7
        %v673 = vsub.s32 1, %v672
        %v674 = vrot.slane %v666, %v673
        %v675 = vlaneseq
        %v676 = vshrl.u32 %v675, 7
        %v677 = vsub.s32 2, %v676
        %v678 = vrot.slane %v666, %v677
        %vm679 = vcmp.eq.s32.totalorder %v670, 1
        %vm680 = vcmp.eq.s32.totalorder %v674, 1
        %vm681 = vcmp.eq.s32.totalorder %v678, 1
        %v682 = vsel %vm679, %v654, 0.0
        %v683 = vsel %vm680, %v655, 0.0
        %v684 = vsel %vm681, %v656, 0.0
        %v685 = vsel %vm679, %v657, 0.0
        %v686 = vsel %vm680, %v658, 0.0
        %v687 = vsel %vm681, %v659, 0.0
        %v688 = vsel %vm679, %v660, 0.0
        %v689 = vsel %vm680, %v661, 0.0
        %v690 = vsel %vm681, %v662, 0.0
        %v691 = vsel %vm679, %v663, 0.0
        %v692 = vsel %vm680, %v664, 0.0
        %v693 = vsel %vm681, %v665, 0.0
        %v694 = vpack.c.bf16 %v685, %v682
        %v695 = vpack.c.bf16 %v686, %v683
        %v696 = vpack.c.bf16 %v687, %v684
        %v697 = vpack.c.bf16 %v691, %v688
        %v698 = vpack.c.bf16 %v692, %v689
        %v699 = vpack.c.bf16 %v693, %v690
        %700 = vst [vmem:[#allocation3 + $0x8] sm:$0xff] %v694
        %701 = vst [vmem:[#allocation3 + $0x10] sm:$0xff] %v695
        %702 = vst.msk [vmem:[#allocation3 + $0x18] sm:$0xff] %vm272, %v696
        %703 = vst [vmem:[#allocation3 + $0x30] sm:$0xff] %v697
        %704 = vst [vmem:[#allocation3 + $0x38] sm:$0xff] %v698
        %705 = vst.msk [vmem:[#allocation3 + $0x40] sm:$0xff] %vm272, %v699
        %v706 = vld [vmem:[#allocation3] sm:$0xff]
        %v707 = vld [vmem:[#allocation3 + $0x8] sm:$0xff]
        %v708 = vld [vmem:[#allocation3 + $0x10] sm:$0xff]
        %v709 = vld [vmem:[#allocation3 + $0x18] sm:$0xff]
        %v710 = vld [vmem:[#allocation3 + $0x28] sm:$0xff]
        %v711 = vld [vmem:[#allocation3 + $0x30] sm:$0xff]
        %v712 = vld [vmem:[#allocation3 + $0x38] sm:$0xff]
        %v713 = vld [vmem:[#allocation3 + $0x40] sm:$0xff]
        %v714 = vunpack.c.l.bf16 %v706
        %v715 = vunpack.c.l.bf16 %v707
        %v716 = vunpack.c.l.bf16 %v708
        %v717 = vunpack.c.l.bf16 %v709
        %v718 = vunpack.c.h.bf16 %v706
        %v719 = vunpack.c.h.bf16 %v707
        %v720 = vunpack.c.h.bf16 %v708
        %v721 = vunpack.c.h.bf16 %v709
        %v722 = vunpack.c.l.bf16 %v710
        %v723 = vunpack.c.l.bf16 %v711
        %v724 = vunpack.c.l.bf16 %v712
        %v725 = vunpack.c.l.bf16 %v713
        %v726 = vunpack.c.h.bf16 %v710
        %v727 = vunpack.c.h.bf16 %v711
        %v728 = vunpack.c.h.bf16 %v712
        %v729 = vunpack.c.h.bf16 %v713
        %746 = vrot.lane.b32.xlu0 %v714, 19
        %v747 = vpop.permute.xlu0 %746
        %748 = vrot.lane.b32.xlu0 %v715, 19
        %v749 = vpop.permute.xlu0 %748
        %750 = vrot.lane.b32.xlu0 %v716, 19
        %v751 = vpop.permute.xlu0 %750
        %752 = vrot.lane.b32.xlu0 %v717, 19
        %v753 = vpop.permute.xlu0 %752
        %754 = vrot.lane.b32.xlu0 %v718, 19
        %v755 = vpop.permute.xlu0 %754
        %756 = vrot.lane.b32.xlu0 %v719, 19
        %v757 = vpop.permute.xlu0 %756
        %758 = vrot.lane.b32.xlu0 %v720, 19
        %v759 = vpop.permute.xlu0 %758
        %760 = vrot.lane.b32.xlu0 %v721, 19
        %v761 = vpop.permute.xlu0 %760
        %762 = vrot.lane.b32.xlu0 %v722, 19
        %v763 = vpop.permute.xlu0 %762
        %764 = vrot.lane.b32.xlu0 %v723, 19
        %v765 = vpop.permute.xlu0 %764
        %766 = vrot.lane.b32.xlu0 %v724, 19
        %v767 = vpop.permute.xlu0 %766
        %768 = vrot.lane.b32.xlu0 %v725, 19
        %v769 = vpop.permute.xlu0 %768
        %770 = vrot.lane.b32.xlu0 %v726, 19
        %v771 = vpop.permute.xlu0 %770
        %772 = vrot.lane.b32.xlu0 %v727, 19
        %v773 = vpop.permute.xlu0 %772
        %774 = vrot.lane.b32.xlu0 %v728, 19
        %v775 = vpop.permute.xlu0 %774
        %776 = vrot.lane.b32.xlu0 %v729, 19
        %v777 = vpop.permute.xlu0 %776
        %v778 = vsel %vm291, %v747, %v749
        %v779 = vsel %vm291, %v749, %v751
        %v780 = vsel %vm291, %v751, %v753
        %v781 = vsel %vm291, %v755, %v757
        %v782 = vsel %vm291, %v757, %v759
        %v783 = vsel %vm291, %v759, %v761
        %v784 = vsel %vm291, %v763, %v765
        %v785 = vsel %vm291, %v765, %v767
        %v786 = vsel %vm291, %v767, %v769
        %v787 = vsel %vm291, %v771, %v773
        %v788 = vsel %vm291, %v773, %v775
        %v789 = vsel %vm291, %v775, %v777
        %802 = vst [vmem:[#allocation2] sm:$0xff] %v778
        %803 = vst [vmem:[#allocation2 + $0x8] sm:$0xff] %v779
        %804 = vst.msk [vmem:[#allocation2 + $0x10] sm:$0xff] %vm272, %v780
        %805 = vst [vmem:[#allocation2 + $0x18] sm:$0xff] %v781
        %806 = vst [vmem:[#allocation2 + $0x20] sm:$0xff] %v782
        %807 = vst.msk [vmem:[#allocation2 + $0x28] sm:$0xff] %vm272, %v783
        %808 = vst [vmem:[#allocation2 + $0x30] sm:$0xff] %v784
        %809 = vst [vmem:[#allocation2 + $0x38] sm:$0xff] %v785
        %810 = vst.msk [vmem:[#allocation2 + $0x40] sm:$0xff] %vm272, %v786
        %811 = vst [vmem:[#allocation2 + $0x48] sm:$0xff] %v787
        %812 = vst [vmem:[#allocation2 + $0x50] sm:$0xff] %v788
        %813 = vst.msk [vmem:[#allocation2 + $0x58] sm:$0xff] %vm272, %v789
        %v814 = vld [vmem:[#allocation3] sm:$0xff]
        %v815 = vld [vmem:[#allocation3 + $0x8] sm:$0xff]
        %v816 = vld [vmem:[#allocation3 + $0x10] sm:$0xff]
        %v817 = vld [vmem:[#allocation3 + $0x18] sm:$0xff]
        %v818 = vld [vmem:[#allocation3 + $0x28] sm:$0xff]
        %v819 = vld [vmem:[#allocation3 + $0x30] sm:$0xff]
        %v820 = vld [vmem:[#allocation3 + $0x38] sm:$0xff]
        %v821 = vld [vmem:[#allocation3 + $0x40] sm:$0xff]
        %v822 = vunpack.c.l.bf16 %v814
        %v823 = vunpack.c.l.bf16 %v815
        %v824 = vunpack.c.l.bf16 %v816
        %v825 = vunpack.c.l.bf16 %v817
        %v826 = vunpack.c.h.bf16 %v814
        %v827 = vunpack.c.h.bf16 %v815
        %v828 = vunpack.c.h.bf16 %v816
        %v829 = vunpack.c.h.bf16 %v817
        %v830 = vunpack.c.l.bf16 %v818
        %v831 = vunpack.c.l.bf16 %v819
        %v832 = vunpack.c.l.bf16 %v820
        %v833 = vunpack.c.l.bf16 %v821
        %v834 = vunpack.c.h.bf16 %v818
        %v835 = vunpack.c.h.bf16 %v819
        %v836 = vunpack.c.h.bf16 %v820
        %v837 = vunpack.c.h.bf16 %v821
        %854 = vrot.lane.b32.xlu0 %v822, 18
        %v855 = vpop.permute.xlu0 %854
        %856 = vrot.lane.b32.xlu0 %v823, 18
        %v857 = vpop.permute.xlu0 %856
        %858 = vrot.lane.b32.xlu0 %v824, 18
        %v859 = vpop.permute.xlu0 %858
        %860 = vrot.lane.b32.xlu0 %v825, 18
        %v861 = vpop.permute.xlu0 %860
        %862 = vrot.lane.b32.xlu0 %v826, 18
        %v863 = vpop.permute.xlu0 %862
        %864 = vrot.lane.b32.xlu0 %v827, 18
        %v865 = vpop.permute.xlu0 %864
        %866 = vrot.lane.b32.xlu0 %v828, 18
        %v867 = vpop.permute.xlu0 %866
        %868 = vrot.lane.b32.xlu0 %v829, 18
        %v869 = vpop.permute.xlu0 %868
        %870 = vrot.lane.b32.xlu0 %v830, 18
        %v871 = vpop.permute.xlu0 %870
        %872 = vrot.lane.b32.xlu0 %v831, 18
        %v873 = vpop.permute.xlu0 %872
        %874 = vrot.lane.b32.xlu0 %v832, 18
        %v875 = vpop.permute.xlu0 %874
        %876 = vrot.lane.b32.xlu0 %v833, 18
        %v877 = vpop.permute.xlu0 %876
        %878 = vrot.lane.b32.xlu0 %v834, 18
        %v879 = vpop.permute.xlu0 %878
        %880 = vrot.lane.b32.xlu0 %v835, 18
        %v881 = vpop.permute.xlu0 %880
        %882 = vrot.lane.b32.xlu0 %v836, 18
        %v883 = vpop.permute.xlu0 %882
        %884 = vrot.lane.b32.xlu0 %v837, 18
        %v885 = vpop.permute.xlu0 %884
        %v886 = vsel %vm317, %v855, %v857
        %v887 = vsel %vm317, %v857, %v859
        %v888 = vsel %vm317, %v859, %v861
        %v889 = vsel %vm317, %v863, %v865
        %v890 = vsel %vm317, %v865, %v867
        %v891 = vsel %vm317, %v867, %v869
        %v892 = vsel %vm317, %v871, %v873
        %v893 = vsel %vm317, %v873, %v875
        %v894 = vsel %vm317, %v875, %v877
        %v895 = vsel %vm317, %v879, %v881
        %v896 = vsel %vm317, %v881, %v883
        %v897 = vsel %vm317, %v883, %v885
        %910 = vst [vmem:[#allocation2 + $0x60] sm:$0xff] %v886
        %911 = vst [vmem:[#allocation2 + $0x68] sm:$0xff] %v887
        %912 = vst.msk [vmem:[#allocation2 + $0x70] sm:$0xff] %vm272, %v888
        %913 = vst [vmem:[#allocation2 + $0x78] sm:$0xff] %v889
        %914 = vst [vmem:[#allocation2 + $0x80] sm:$0xff] %v890
        %915 = vst.msk [vmem:[#allocation2 + $0x88] sm:$0xff] %vm272, %v891
        %916 = vst [vmem:[#allocation2 + $0x90] sm:$0xff] %v892
        %917 = vst [vmem:[#allocation2 + $0x98] sm:$0xff] %v893
        %918 = vst.msk [vmem:[#allocation2 + $0xa0] sm:$0xff] %vm272, %v894
        %919 = vst [vmem:[#allocation2 + $0xa8] sm:$0xff] %v895
        %920 = vst [vmem:[#allocation2 + $0xb0] sm:$0xff] %v896
        %921 = vst.msk [vmem:[#allocation2 + $0xb8] sm:$0xff] %vm272, %v897
        %v922 = vld [vmem:[#allocation3] sm:$0xff]
        %v923 = vld [vmem:[#allocation3 + $0x8] sm:$0xff]
        %v924 = vld [vmem:[#allocation3 + $0x10] sm:$0xff]
        %v925 = vld [vmem:[#allocation3 + $0x18] sm:$0xff]
        %v926 = vld [vmem:[#allocation3 + $0x28] sm:$0xff]
        %v927 = vld [vmem:[#allocation3 + $0x30] sm:$0xff]
        %v928 = vld [vmem:[#allocation3 + $0x38] sm:$0xff]
        %v929 = vld [vmem:[#allocation3 + $0x40] sm:$0xff]
        %v930 = vunpack.c.l.bf16 %v922
        %v931 = vunpack.c.l.bf16 %v923
        %v932 = vunpack.c.l.bf16 %v924
        %v933 = vunpack.c.l.bf16 %v925
        %v934 = vunpack.c.h.bf16 %v922
        %v935 = vunpack.c.h.bf16 %v923
        %v936 = vunpack.c.h.bf16 %v924
        %v937 = vunpack.c.h.bf16 %v925
        %v938 = vunpack.c.l.bf16 %v926
        %v939 = vunpack.c.l.bf16 %v927
        %v940 = vunpack.c.l.bf16 %v928
        %v941 = vunpack.c.l.bf16 %v929
        %v942 = vunpack.c.h.bf16 %v926
        %v943 = vunpack.c.h.bf16 %v927
        %v944 = vunpack.c.h.bf16 %v928
        %v945 = vunpack.c.h.bf16 %v929
        %962 = vrot.lane.b32.xlu0 %v930, 17
        %v963 = vpop.permute.xlu0 %962
        %964 = vrot.lane.b32.xlu0 %v931, 17
        %v965 = vpop.permute.xlu0 %964
        %966 = vrot.lane.b32.xlu0 %v932, 17
        %v967 = vpop.permute.xlu0 %966
        %968 = vrot.lane.b32.xlu0 %v933, 17
        %v969 = vpop.permute.xlu0 %968
        %970 = vrot.lane.b32.xlu0 %v934, 17
        %v971 = vpop.permute.xlu0 %970
        %972 = vrot.lane.b32.xlu0 %v935, 17
        %v973 = vpop.permute.xlu0 %972
        %974 = vrot.lane.b32.xlu0 %v936, 17
        %v975 = vpop.permute.xlu0 %974
        %976 = vrot.lane.b32.xlu0 %v937, 17
        %v977 = vpop.permute.xlu0 %976
        %978 = vrot.lane.b32.xlu0 %v938, 17
        %v979 = vpop.permute.xlu0 %978
        %980 = vrot.lane.b32.xlu0 %v939, 17
        %v981 = vpop.permute.xlu0 %980
        %982 = vrot.lane.b32.xlu0 %v940, 17
        %v983 = vpop.permute.xlu0 %982
        %984 = vrot.lane.b32.xlu0 %v941, 17
        %v985 = vpop.permute.xlu0 %984
        %986 = vrot.lane.b32.xlu0 %v942, 17
        %v987 = vpop.permute.xlu0 %986
        %988 = vrot.lane.b32.xlu0 %v943, 17
        %v989 = vpop.permute.xlu0 %988
        %990 = vrot.lane.b32.xlu0 %v944, 17
        %v991 = vpop.permute.xlu0 %990
        %992 = vrot.lane.b32.xlu0 %v945, 17
        %v993 = vpop.permute.xlu0 %992
        %v994 = vsel %vm343, %v963, %v965
        %v995 = vsel %vm343, %v965, %v967
        %v996 = vsel %vm343, %v967, %v969
        %v997 = vsel %vm343, %v971, %v973
        %v998 = vsel %vm343, %v973, %v975
        %v999 = vsel %vm343, %v975, %v977
        %v1000 = vsel %vm343, %v979, %v981
        %v1001 = vsel %vm343, %v981, %v983
        %v1002 = vsel %vm343, %v983, %v985
        %v1003 = vsel %vm343, %v987, %v989
        %v1004 = vsel %vm343, %v989, %v991
        %v1005 = vsel %vm343, %v991, %v993
        %1018 = vst [vmem:[#allocation2 + $0xc0] sm:$0xff] %v994
        %1019 = vst [vmem:[#allocation2 + $0xc8] sm:$0xff] %v995
        %1020 = vst.msk [vmem:[#allocation2 + $0xd0] sm:$0xff] %vm272, %v996
        %1021 = vst [vmem:[#allocation2 + $0xd8] sm:$0xff] %v997
        %1022 = vst [vmem:[#allocation2 + $0xe0] sm:$0xff] %v998
        %1023 = vst.msk [vmem:[#allocation2 + $0xe8] sm:$0xff] %vm272, %v999
        %1024 = vst [vmem:[#allocation2 + $0xf0] sm:$0xff] %v1000
        %1025 = vst [vmem:[#allocation2 + $0xf8] sm:$0xff] %v1001
        %1026 = vst.msk [vmem:[#allocation2 + $0x100] sm:$0xff] %vm272, %v1002
        %1027 = vst [vmem:[#allocation2 + $0x108] sm:$0xff] %v1003
        %1028 = vst [vmem:[#allocation2 + $0x110] sm:$0xff] %v1004
        %1029 = vst.msk [vmem:[#allocation2 + $0x118] sm:$0xff] %vm272, %v1005
        %v1030 = vld [vmem:[#allocation3] sm:$0xff]
        %v1031 = vld [vmem:[#allocation3 + $0x8] sm:$0xff]
        %v1032 = vld [vmem:[#allocation3 + $0x10] sm:$0xff]
        %v1033 = vld [vmem:[#allocation3 + $0x18] sm:$0xff]
        %v1034 = vld [vmem:[#allocation3 + $0x28] sm:$0xff]
        %v1035 = vld [vmem:[#allocation3 + $0x30] sm:$0xff]
        %v1036 = vld [vmem:[#allocation3 + $0x38] sm:$0xff]
        %v1037 = vld [vmem:[#allocation3 + $0x40] sm:$0xff]
        %v1038 = vunpack.c.l.bf16 %v1030
        %v1039 = vunpack.c.l.bf16 %v1031
        %v1040 = vunpack.c.l.bf16 %v1032
        %v1041 = vunpack.c.l.bf16 %v1033
        %v1042 = vunpack.c.h.bf16 %v1030
        %v1043 = vunpack.c.h.bf16 %v1031
        %v1044 = vunpack.c.h.bf16 %v1032
        %v1045 = vunpack.c.h.bf16 %v1033
        %v1046 = vunpack.c.l.bf16 %v1034
        %v1047 = vunpack.c.l.bf16 %v1035
        %v1048 = vunpack.c.l.bf16 %v1036
        %v1049 = vunpack.c.l.bf16 %v1037
        %v1050 = vunpack.c.h.bf16 %v1034
        %v1051 = vunpack.c.h.bf16 %v1035
        %v1052 = vunpack.c.h.bf16 %v1036
        %v1053 = vunpack.c.h.bf16 %v1037
        %1070 = vrot.lane.b32.xlu0 %v1038, 1
        %v1071 = vpop.permute.xlu0 %1070
        %1072 = vrot.lane.b32.xlu0 %v1039, 1
        %v1073 = vpop.permute.xlu0 %1072
        %1074 = vrot.lane.b32.xlu0 %v1040, 1
        %v1075 = vpop.permute.xlu0 %1074
        %1076 = vrot.lane.b32.xlu0 %v1041, 1
        %v1077 = vpop.permute.xlu0 %1076
        %1078 = vrot.lane.b32.xlu0 %v1042, 1
        %v1079 = vpop.permute.xlu0 %1078
        %1080 = vrot.lane.b32.xlu0 %v1043, 1
        %v1081 = vpop.permute.xlu0 %1080
        %1082 = vrot.lane.b32.xlu0 %v1044, 1
        %v1083 = vpop.permute.xlu0 %1082
        %1084 = vrot.lane.b32.xlu0 %v1045, 1
        %v1085 = vpop.permute.xlu0 %1084
        %1086 = vrot.lane.b32.xlu0 %v1046, 1
        %v1087 = vpop.permute.xlu0 %1086
        %1088 = vrot.lane.b32.xlu0 %v1047, 1
        %v1089 = vpop.permute.xlu0 %1088
        %1090 = vrot.lane.b32.xlu0 %v1048, 1
        %v1091 = vpop.permute.xlu0 %1090
        %1092 = vrot.lane.b32.xlu0 %v1049, 1
        %v1093 = vpop.permute.xlu0 %1092
        %1094 = vrot.lane.b32.xlu0 %v1050, 1
        %v1095 = vpop.permute.xlu0 %1094
        %1096 = vrot.lane.b32.xlu0 %v1051, 1
        %v1097 = vpop.permute.xlu0 %1096
        %1098 = vrot.lane.b32.xlu0 %v1052, 1
        %v1099 = vpop.permute.xlu0 %1098
        %1100 = vrot.lane.b32.xlu0 %v1053, 1
        %v1101 = vpop.permute.xlu0 %1100
        %v1102 = vsel %vm368, %v1071, %v1073
        %v1103 = vsel %vm368, %v1073, %v1075
        %v1104 = vsel %vm368, %v1075, %v1077
        %v1105 = vsel %vm368, %v1079, %v1081
        %v1106 = vsel %vm368, %v1081, %v1083
        %v1107 = vsel %vm368, %v1083, %v1085
        %v1108 = vsel %vm368, %v1087, %v1089
        %v1109 = vsel %vm368, %v1089, %v1091
        %v1110 = vsel %vm368, %v1091, %v1093
        %v1111 = vsel %vm368, %v1095, %v1097
        %v1112 = vsel %vm368, %v1097, %v1099
        %v1113 = vsel %vm368, %v1099, %v1101
        %1126 = vst [vmem:[#allocation2 + $0x120] sm:$0xff] %v1102
        %1127 = vst [vmem:[#allocation2 + $0x128] sm:$0xff] %v1103
        %1128 = vst.msk [vmem:[#allocation2 + $0x130] sm:$0xff] %vm272, %v1104
        %1129 = vst [vmem:[#allocation2 + $0x138] sm:$0xff] %v1105
        %1130 = vst [vmem:[#allocation2 + $0x140] sm:$0xff] %v1106
        %1131 = vst.msk [vmem:[#allocation2 + $0x148] sm:$0xff] %vm272, %v1107
        %1132 = vst [vmem:[#allocation2 + $0x150] sm:$0xff] %v1108
        %1133 = vst [vmem:[#allocation2 + $0x158] sm:$0xff] %v1109
        %1134 = vst.msk [vmem:[#allocation2 + $0x160] sm:$0xff] %vm272, %v1110
        %1135 = vst [vmem:[#allocation2 + $0x168] sm:$0xff] %v1111
        %1136 = vst [vmem:[#allocation2 + $0x170] sm:$0xff] %v1112
        %1137 = vst.msk [vmem:[#allocation2 + $0x178] sm:$0xff] %vm272, %v1113
        %v1138 = vld [vmem:[#allocation3 + $0x8] sm:$0xff]
        %v1139 = vld [vmem:[#allocation3 + $0x10] sm:$0xff]
        %v1140 = vld [vmem:[#allocation3 + $0x18] sm:$0xff]
        %v1141 = vld [vmem:[#allocation3 + $0x30] sm:$0xff]
        %v1142 = vld [vmem:[#allocation3 + $0x38] sm:$0xff]
        %v1143 = vld [vmem:[#allocation3 + $0x40] sm:$0xff]
        %v1144 = vunpack.c.l.bf16 %v1138
        %v1145 = vunpack.c.l.bf16 %v1139
        %v1146 = vunpack.c.l.bf16 %v1140
        %v1147 = vunpack.c.h.bf16 %v1138
        %v1148 = vunpack.c.h.bf16 %v1139
        %v1149 = vunpack.c.h.bf16 %v1140
        %v1150 = vunpack.c.l.bf16 %v1141
        %v1151 = vunpack.c.l.bf16 %v1142
        %v1152 = vunpack.c.l.bf16 %v1143
        %v1153 = vunpack.c.h.bf16 %v1141
        %v1154 = vunpack.c.h.bf16 %v1142
        %v1155 = vunpack.c.h.bf16 %v1143
        %1156 = vst [vmem:[#allocation2 + $0x180] sm:$0xff] %v1144
        %1157 = vst [vmem:[#allocation2 + $0x188] sm:$0xff] %v1145
        %1158 = vst.msk [vmem:[#allocation2 + $0x190] sm:$0xff] %vm272, %v1146
        %1159 = vst [vmem:[#allocation2 + $0x198] sm:$0xff] %v1147
        %1160 = vst [vmem:[#allocation2 + $0x1a0] sm:$0xff] %v1148
        %1161 = vst.msk [vmem:[#allocation2 + $0x1a8] sm:$0xff] %vm272, %v1149
        %1162 = vst [vmem:[#allocation2 + $0x1b0] sm:$0xff] %v1150
        %1163 = vst [vmem:[#allocation2 + $0x1b8] sm:$0xff] %v1151
        %1164 = vst.msk [vmem:[#allocation2 + $0x1c0] sm:$0xff] %vm272, %v1152
        %1165 = vst [vmem:[#allocation2 + $0x1c8] sm:$0xff] %v1153
        %1166 = vst [vmem:[#allocation2 + $0x1d0] sm:$0xff] %v1154
        %1167 = vst.msk [vmem:[#allocation2 + $0x1d8] sm:$0xff] %vm272, %v1155
        %v1168 = vld [vmem:[#allocation3 + $0x8] sm:$0xff]
        %v1169 = vld [vmem:[#allocation3 + $0x10] sm:$0xff]
        %v1170 = vld [vmem:[#allocation3 + $0x18] sm:$0xff]
        %v1171 = vld [vmem:[#allocation3 + $0x30] sm:$0xff]
        %v1172 = vld [vmem:[#allocation3 + $0x38] sm:$0xff]
        %v1173 = vld [vmem:[#allocation3 + $0x40] sm:$0xff]
        %v1174 = vunpack.c.l.bf16 %v1168
        %v1175 = vunpack.c.l.bf16 %v1169
        %v1176 = vunpack.c.l.bf16 %v1170
        %v1177 = vunpack.c.h.bf16 %v1168
        %v1178 = vunpack.c.h.bf16 %v1169
        %v1179 = vunpack.c.h.bf16 %v1170
        %v1180 = vunpack.c.l.bf16 %v1171
        %v1181 = vunpack.c.l.bf16 %v1172
        %v1182 = vunpack.c.l.bf16 %v1173
        %v1183 = vunpack.c.h.bf16 %v1171
        %v1184 = vunpack.c.h.bf16 %v1172
        %v1185 = vunpack.c.h.bf16 %v1173
        %1198 = vrot.lane.b32.xlu0 %v1174, 127
        %v1199 = vpop.permute.xlu0 %1198
        %1200 = vrot.lane.b32.xlu0 %v1175, 127
        %v1201 = vpop.permute.xlu0 %1200
        %1202 = vrot.lane.b32.xlu0 %v1176, 127
        %v1203 = vpop.permute.xlu0 %1202
        %1204 = vrot.lane.b32.xlu0 %v1177, 127
        %v1205 = vpop.permute.xlu0 %1204
        %1206 = vrot.lane.b32.xlu0 %v1178, 127
        %v1207 = vpop.permute.xlu0 %1206
        %1208 = vrot.lane.b32.xlu0 %v1179, 127
        %v1209 = vpop.permute.xlu0 %1208
        %1210 = vrot.lane.b32.xlu0 %v1180, 127
        %v1211 = vpop.permute.xlu0 %1210
        %1212 = vrot.lane.b32.xlu0 %v1181, 127
        %v1213 = vpop.permute.xlu0 %1212
        %1214 = vrot.lane.b32.xlu0 %v1182, 127
        %v1215 = vpop.permute.xlu0 %1214
        %1216 = vrot.lane.b32.xlu0 %v1183, 127
        %v1217 = vpop.permute.xlu0 %1216
        %1218 = vrot.lane.b32.xlu0 %v1184, 127
        %v1219 = vpop.permute.xlu0 %1218
        %1220 = vrot.lane.b32.xlu0 %v1185, 127
        %v1221 = vpop.permute.xlu0 %1220
        %v1222 = vsel %vm400, %v1199, %v1201
        %v1223 = vsel %vm400, %v1201, %v1203
        %v1224 = vsel %vm400, %v1205, %v1207
        %v1225 = vsel %vm400, %v1207, %v1209
        %v1226 = vsel %vm400, %v1211, %v1213
        %v1227 = vsel %vm400, %v1213, %v1215
        %v1228 = vsel %vm400, %v1217, %v1219
        %v1229 = vsel %vm400, %v1219, %v1221
        %1242 = vst [vmem:[#allocation2 + $0x1e0] sm:$0xff] %v1222
        %1243 = vst [vmem:[#allocation2 + $0x1e8] sm:$0xff] %v1223
        %1244 = vst.msk [vmem:[#allocation2 + $0x1f0] sm:$0xff] %vm272, %v1203
        %1245 = vst [vmem:[#allocation2 + $0x1f8] sm:$0xff] %v1224
        %1246 = vst [vmem:[#allocation2 + $0x200] sm:$0xff] %v1225
        %1247 = vst.msk [vmem:[#allocation2 + $0x208] sm:$0xff] %vm272, %v1209
        %1248 = vst [vmem:[#allocation2 + $0x210] sm:$0xff] %v1226
        %1249 = vst [vmem:[#allocation2 + $0x218] sm:$0xff] %v1227
        %1250 = vst.msk [vmem:[#allocation2 + $0x220] sm:$0xff] %vm272, %v1215
        %1251 = vst [vmem:[#allocation2 + $0x228] sm:$0xff] %v1228
        %1252 = vst [vmem:[#allocation2 + $0x230] sm:$0xff] %v1229
        %1253 = vst.msk [vmem:[#allocation2 + $0x238] sm:$0xff] %vm272, %v1221
        %v1254 = vld [vmem:[#allocation3 + $0x8] sm:$0xff]
        %v1255 = vld [vmem:[#allocation3 + $0x10] sm:$0xff]
        %v1256 = vld [vmem:[#allocation3 + $0x18] sm:$0xff]
        %v1257 = vld [vmem:[#allocation3 + $0x30] sm:$0xff]
        %v1258 = vld [vmem:[#allocation3 + $0x38] sm:$0xff]
        %v1259 = vld [vmem:[#allocation3 + $0x40] sm:$0xff]
        %v1260 = vunpack.c.l.bf16 %v1254
        %v1261 = vunpack.c.l.bf16 %v1255
        %v1262 = vunpack.c.l.bf16 %v1256
        %v1263 = vunpack.c.h.bf16 %v1254
        %v1264 = vunpack.c.h.bf16 %v1255
        %v1265 = vunpack.c.h.bf16 %v1256
        %v1266 = vunpack.c.l.bf16 %v1257
        %v1267 = vunpack.c.l.bf16 %v1258
        %v1268 = vunpack.c.l.bf16 %v1259
        %v1269 = vunpack.c.h.bf16 %v1257
        %v1270 = vunpack.c.h.bf16 %v1258
        %v1271 = vunpack.c.h.bf16 %v1259
        %1284 = vrot.lane.b32.xlu0 %v1260, 111
        %v1285 = vpop.permute.xlu0 %1284
        %1286 = vrot.lane.b32.xlu0 %v1261, 111
        %v1287 = vpop.permute.xlu0 %1286
        %1288 = vrot.lane.b32.xlu0 %v1262, 111
        %v1289 = vpop.permute.xlu0 %1288
        %1290 = vrot.lane.b32.xlu0 %v1263, 111
        %v1291 = vpop.permute.xlu0 %1290
        %1292 = vrot.lane.b32.xlu0 %v1264, 111
        %v1293 = vpop.permute.xlu0 %1292
        %1294 = vrot.lane.b32.xlu0 %v1265, 111
        %v1295 = vpop.permute.xlu0 %1294
        %1296 = vrot.lane.b32.xlu0 %v1266, 111
        %v1297 = vpop.permute.xlu0 %1296
        %1298 = vrot.lane.b32.xlu0 %v1267, 111
        %v1299 = vpop.permute.xlu0 %1298
        %1300 = vrot.lane.b32.xlu0 %v1268, 111
        %v1301 = vpop.permute.xlu0 %1300
        %1302 = vrot.lane.b32.xlu0 %v1269, 111
        %v1303 = vpop.permute.xlu0 %1302
        %1304 = vrot.lane.b32.xlu0 %v1270, 111
        %v1305 = vpop.permute.xlu0 %1304
        %1306 = vrot.lane.b32.xlu0 %v1271, 111
        %v1307 = vpop.permute.xlu0 %1306
        %v1308 = vsel %vm421, %v1285, %v1287
        %v1309 = vsel %vm421, %v1287, %v1289
        %v1310 = vsel %vm421, %v1291, %v1293
        %v1311 = vsel %vm421, %v1293, %v1295
        %v1312 = vsel %vm421, %v1297, %v1299
        %v1313 = vsel %vm421, %v1299, %v1301
        %v1314 = vsel %vm421, %v1303, %v1305
        %v1315 = vsel %vm421, %v1305, %v1307
        %1328 = vst [vmem:[#allocation2 + $0x240] sm:$0xff] %v1308
        %1329 = vst [vmem:[#allocation2 + $0x248] sm:$0xff] %v1309
        %1330 = vst.msk [vmem:[#allocation2 + $0x250] sm:$0xff] %vm272, %v1289
        %1331 = vst [vmem:[#allocation2 + $0x258] sm:$0xff] %v1310
        %1332 = vst [vmem:[#allocation2 + $0x260] sm:$0xff] %v1311
        %1333 = vst.msk [vmem:[#allocation2 + $0x268] sm:$0xff] %vm272, %v1295
        %1334 = vst [vmem:[#allocation2 + $0x270] sm:$0xff] %v1312
        %1335 = vst [vmem:[#allocation2 + $0x278] sm:$0xff] %v1313
        %1336 = vst.msk [vmem:[#allocation2 + $0x280] sm:$0xff] %vm272, %v1301
        %1337 = vst [vmem:[#allocation2 + $0x288] sm:$0xff] %v1314
        %1338 = vst [vmem:[#allocation2 + $0x290] sm:$0xff] %v1315
        %1339 = vst.msk [vmem:[#allocation2 + $0x298] sm:$0xff] %vm272, %v1307
        %v1340 = vld [vmem:[#allocation3 + $0x8] sm:$0xff]
        %v1341 = vld [vmem:[#allocation3 + $0x10] sm:$0xff]
        %v1342 = vld [vmem:[#allocation3 + $0x18] sm:$0xff]
        %v1343 = vld [vmem:[#allocation3 + $0x30] sm:$0xff]
        %v1344 = vld [vmem:[#allocation3 + $0x38] sm:$0xff]
        %v1345 = vld [vmem:[#allocation3 + $0x40] sm:$0xff]
        %v1346 = vunpack.c.l.bf16 %v1340
        %v1347 = vunpack.c.l.bf16 %v1341
        %v1348 = vunpack.c.l.bf16 %v1342
        %v1349 = vunpack.c.h.bf16 %v1340
        %v1350 = vunpack.c.h.bf16 %v1341
        %v1351 = vunpack.c.h.bf16 %v1342
        %v1352 = vunpack.c.l.bf16 %v1343
        %v1353 = vunpack.c.l.bf16 %v1344
        %v1354 = vunpack.c.l.bf16 %v1345
        %v1355 = vunpack.c.h.bf16 %v1343
        %v1356 = vunpack.c.h.bf16 %v1344
        %v1357 = vunpack.c.h.bf16 %v1345
        %1370 = vrot.lane.b32.xlu0 %v1346, 110
        %v1371 = vpop.permute.xlu0 %1370
        %1372 = vrot.lane.b32.xlu0 %v1347, 110
        %v1373 = vpop.permute.xlu0 %1372
        %1374 = vrot.lane.b32.xlu0 %v1348, 110
        %v1375 = vpop.permute.xlu0 %1374
        %1376 = vrot.lane.b32.xlu0 %v1349, 110
        %v1377 = vpop.permute.xlu0 %1376
        %1378 = vrot.lane.b32.xlu0 %v1350, 110
        %v1379 = vpop.permute.xlu0 %1378
        %1380 = vrot.lane.b32.xlu0 %v1351, 110
        %v1381 = vpop.permute.xlu0 %1380
        %1382 = vrot.lane.b32.xlu0 %v1352, 110
        %v1383 = vpop.permute.xlu0 %1382
        %1384 = vrot.lane.b32.xlu0 %v1353, 110
        %v1385 = vpop.permute.xlu0 %1384
        %1386 = vrot.lane.b32.xlu0 %v1354, 110
        %v1387 = vpop.permute.xlu0 %1386
        %1388 = vrot.lane.b32.xlu0 %v1355, 110
        %v1389 = vpop.permute.xlu0 %1388
        %1390 = vrot.lane.b32.xlu0 %v1356, 110
        %v1391 = vpop.permute.xlu0 %1390
        %1392 = vrot.lane.b32.xlu0 %v1357, 110
        %v1393 = vpop.permute.xlu0 %1392
        %v1394 = vsel %vm443, %v1371, %v1373
        %v1395 = vsel %vm443, %v1373, %v1375
        %v1396 = vsel %vm443, %v1377, %v1379
        %v1397 = vsel %vm443, %v1379, %v1381
        %v1398 = vsel %vm443, %v1383, %v1385
        %v1399 = vsel %vm443, %v1385, %v1387
        %v1400 = vsel %vm443, %v1389, %v1391
        %v1401 = vsel %vm443, %v1391, %v1393
        %1414 = vst [vmem:[#allocation2 + $0x2a0] sm:$0xff] %v1394
        %1415 = vst [vmem:[#allocation2 + $0x2a8] sm:$0xff] %v1395
        %1416 = vst.msk [vmem:[#allocation2 + $0x2b0] sm:$0xff] %vm272, %v1375
        %1417 = vst [vmem:[#allocation2 + $0x2b8] sm:$0xff] %v1396
        %1418 = vst [vmem:[#allocation2 + $0x2c0] sm:$0xff] %v1397
        %1419 = vst.msk [vmem:[#allocation2 + $0x2c8] sm:$0xff] %vm272, %v1381
        %1420 = vst [vmem:[#allocation2 + $0x2d0] sm:$0xff] %v1398
        %1421 = vst [vmem:[#allocation2 + $0x2d8] sm:$0xff] %v1399
        %1422 = vst.msk [vmem:[#allocation2 + $0x2e0] sm:$0xff] %vm272, %v1387
        %1423 = vst [vmem:[#allocation2 + $0x2e8] sm:$0xff] %v1400
        %1424 = vst [vmem:[#allocation2 + $0x2f0] sm:$0xff] %v1401
        %1425 = vst.msk [vmem:[#allocation2 + $0x2f8] sm:$0xff] %vm272, %v1393
        %v1426 = vld [vmem:[#allocation3 + $0x8] sm:$0xff]
        %v1427 = vld [vmem:[#allocation3 + $0x10] sm:$0xff]
        %v1428 = vld [vmem:[#allocation3 + $0x18] sm:$0xff]
        %v1429 = vld [vmem:[#allocation3 + $0x30] sm:$0xff]
        %v1430 = vld [vmem:[#allocation3 + $0x38] sm:$0xff]
        %v1431 = vld [vmem:[#allocation3 + $0x40] sm:$0xff]
        %v1432 = vunpack.c.l.bf16 %v1426
        %v1433 = vunpack.c.l.bf16 %v1427
        %v1434 = vunpack.c.l.bf16 %v1428
        %v1435 = vunpack.c.h.bf16 %v1426
        %v1436 = vunpack.c.h.bf16 %v1427
        %v1437 = vunpack.c.h.bf16 %v1428
        %v1438 = vunpack.c.l.bf16 %v1429
        %v1439 = vunpack.c.l.bf16 %v1430
        %v1440 = vunpack.c.l.bf16 %v1431
        %v1441 = vunpack.c.h.bf16 %v1429
        %v1442 = vunpack.c.h.bf16 %v1430
        %v1443 = vunpack.c.h.bf16 %v1431
        %1456 = vrot.lane.b32.xlu0 %v1432, 109
        %v1457 = vpop.permute.xlu0 %1456
        %1458 = vrot.lane.b32.xlu0 %v1433, 109
        %v1459 = vpop.permute.xlu0 %1458
        %1460 = vrot.lane.b32.xlu0 %v1434, 109
        %v1461 = vpop.permute.xlu0 %1460
        %1462 = vrot.lane.b32.xlu0 %v1435, 109
        %v1463 = vpop.permute.xlu0 %1462
        %1464 = vrot.lane.b32.xlu0 %v1436, 109
        %v1465 = vpop.permute.xlu0 %1464
        %1466 = vrot.lane.b32.xlu0 %v1437, 109
        %v1467 = vpop.permute.xlu0 %1466
        %1468 = vrot.lane.b32.xlu0 %v1438, 109
        %v1469 = vpop.permute.xlu0 %1468
        %1470 = vrot.lane.b32.xlu0 %v1439, 109
        %v1471 = vpop.permute.xlu0 %1470
        %1472 = vrot.lane.b32.xlu0 %v1440, 109
        %v1473 = vpop.permute.xlu0 %1472
        %1474 = vrot.lane.b32.xlu0 %v1441, 109
        %v1475 = vpop.permute.xlu0 %1474
        %1476 = vrot.lane.b32.xlu0 %v1442, 109
        %v1477 = vpop.permute.xlu0 %1476
        %1478 = vrot.lane.b32.xlu0 %v1443, 109
        %v1479 = vpop.permute.xlu0 %1478
        %v1480 = vsel %vm464, %v1457, %v1459
        %v1481 = vsel %vm464, %v1459, %v1461
        %v1482 = vsel %vm464, %v1463, %v1465
        %v1483 = vsel %vm464, %v1465, %v1467
        %v1484 = vsel %vm464, %v1469, %v1471
        %v1485 = vsel %vm464, %v1471, %v1473
        %v1486 = vsel %vm464, %v1475, %v1477
        %v1487 = vsel %vm464, %v1477, %v1479
        %1500 = vst [vmem:[#allocation2 + $0x300] sm:$0xff] %v1480
        %1501 = vst [vmem:[#allocation2 + $0x308] sm:$0xff] %v1481
        %1502 = vst.msk [vmem:[#allocation2 + $0x310] sm:$0xff] %vm272, %v1461
        %1503 = vst [vmem:[#allocation2 + $0x318] sm:$0xff] %v1482
        %1504 = vst [vmem:[#allocation2 + $0x320] sm:$0xff] %v1483
        %1505 = vst.msk [vmem:[#allocation2 + $0x328] sm:$0xff] %vm272, %v1467
        %1506 = vst [vmem:[#allocation2 + $0x330] sm:$0xff] %v1484
        %1507 = vst [vmem:[#allocation2 + $0x338] sm:$0xff] %v1485
        %1508 = vst.msk [vmem:[#allocation2 + $0x340] sm:$0xff] %vm272, %v1473
        %1509 = vst [vmem:[#allocation2 + $0x348] sm:$0xff] %v1486
        %1510 = vst [vmem:[#allocation2 + $0x350] sm:$0xff] %v1487
        %1511 = vst.msk [vmem:[#allocation2 + $0x358] sm:$0xff] %vm272, %v1479
        %v1512 = vld [vmem:[#allocation2] sm:$0xff]
        %v1513 = vld [vmem:[#allocation2 + $0x8] sm:$0xff]
        %v1514 = vld [vmem:[#allocation2 + $0x10] sm:$0xff]
        %v1515 = vld [vmem:[#allocation2 + $0x18] sm:$0xff]
        %v1516 = vld [vmem:[#allocation2 + $0x20] sm:$0xff]
        %v1517 = vld [vmem:[#allocation2 + $0x28] sm:$0xff]
        %v1518 = vld [vmem:[#allocation2 + $0x30] sm:$0xff]
        %v1519 = vld [vmem:[#allocation2 + $0x38] sm:$0xff]
        %v1520 = vld [vmem:[#allocation2 + $0x40] sm:$0xff]
        %v1521 = vld [vmem:[#allocation2 + $0x48] sm:$0xff]
        %v1522 = vld [vmem:[#allocation2 + $0x50] sm:$0xff]
        %v1523 = vld [vmem:[#allocation2 + $0x58] sm:$0xff]
        %v1524 = vld [vmem:[#allocation2 + $0x60] sm:$0xff]
        %v1525 = vld [vmem:[#allocation2 + $0x68] sm:$0xff]
        %v1526 = vld [vmem:[#allocation2 + $0x70] sm:$0xff]
        %v1527 = vld [vmem:[#allocation2 + $0x78] sm:$0xff]
        %v1528 = vld [vmem:[#allocation2 + $0x80] sm:$0xff]
        %v1529 = vld [vmem:[#allocation2 + $0x88] sm:$0xff]
        %v1530 = vld [vmem:[#allocation2 + $0x90] sm:$0xff]
        %v1531 = vld [vmem:[#allocation2 + $0x98] sm:$0xff]
        %v1532 = vld [vmem:[#allocation2 + $0xa0] sm:$0xff]
        %v1533 = vld [vmem:[#allocation2 + $0xa8] sm:$0xff]
        %v1534 = vld [vmem:[#allocation2 + $0xb0] sm:$0xff]
        %v1535 = vld [vmem:[#allocation2 + $0xb8] sm:$0xff]
        %v1536 = vld [vmem:[#allocation2 + $0xc0] sm:$0xff]
        %v1537 = vld [vmem:[#allocation2 + $0xc8] sm:$0xff]
        %v1538 = vld [vmem:[#allocation2 + $0xd0] sm:$0xff]
        %v1539 = vld [vmem:[#allocation2 + $0xd8] sm:$0xff]
        %v1540 = vld [vmem:[#allocation2 + $0xe0] sm:$0xff]
        %v1541 = vld [vmem:[#allocation2 + $0xe8] sm:$0xff]
        %v1542 = vld [vmem:[#allocation2 + $0xf0] sm:$0xff]
        %v1543 = vld [vmem:[#allocation2 + $0xf8] sm:$0xff]
        %v1544 = vld [vmem:[#allocation2 + $0x100] sm:$0xff]
        %v1545 = vld [vmem:[#allocation2 + $0x108] sm:$0xff]
        %v1546 = vld [vmem:[#allocation2 + $0x110] sm:$0xff]
        %v1547 = vld [vmem:[#allocation2 + $0x118] sm:$0xff]
        %v1548 = vld [vmem:[#allocation2 + $0x120] sm:$0xff]
        %v1549 = vld [vmem:[#allocation2 + $0x128] sm:$0xff]
        %v1550 = vld [vmem:[#allocation2 + $0x130] sm:$0xff]
        %v1551 = vld [vmem:[#allocation2 + $0x138] sm:$0xff]
        %v1552 = vld [vmem:[#allocation2 + $0x140] sm:$0xff]
        %v1553 = vld [vmem:[#allocation2 + $0x148] sm:$0xff]
        %v1554 = vld [vmem:[#allocation2 + $0x150] sm:$0xff]
        %v1555 = vld [vmem:[#allocation2 + $0x158] sm:$0xff]
        %v1556 = vld [vmem:[#allocation2 + $0x160] sm:$0xff]
        %v1557 = vld [vmem:[#allocation2 + $0x168] sm:$0xff]
        %v1558 = vld [vmem:[#allocation2 + $0x170] sm:$0xff]
        %v1559 = vld [vmem:[#allocation2 + $0x178] sm:$0xff]
        %v1560 = vld [vmem:[#allocation2 + $0x180] sm:$0xff]
        %v1561 = vld [vmem:[#allocation2 + $0x188] sm:$0xff]
        %v1562 = vld [vmem:[#allocation2 + $0x190] sm:$0xff]
        %v1563 = vld [vmem:[#allocation2 + $0x198] sm:$0xff]
        %v1564 = vld [vmem:[#allocation2 + $0x1a0] sm:$0xff]
        %v1565 = vld [vmem:[#allocation2 + $0x1a8] sm:$0xff]
        %v1566 = vld [vmem:[#allocation2 + $0x1b0] sm:$0xff]
        %v1567 = vld [vmem:[#allocation2 + $0x1b8] sm:$0xff]
        %v1568 = vld [vmem:[#allocation2 + $0x1c0] sm:$0xff]
        %v1569 = vld [vmem:[#allocation2 + $0x1c8] sm:$0xff]
        %v1570 = vld [vmem:[#allocation2 + $0x1d0] sm:$0xff]
        %v1571 = vld [vmem:[#allocation2 + $0x1d8] sm:$0xff]
        %v1572 = vld [vmem:[#allocation2 + $0x1e0] sm:$0xff]
        %v1573 = vld [vmem:[#allocation2 + $0x1e8] sm:$0xff]
        %v1574 = vld [vmem:[#allocation2 + $0x1f0] sm:$0xff]
        %v1575 = vld [vmem:[#allocation2 + $0x1f8] sm:$0xff]
        %v1576 = vld [vmem:[#allocation2 + $0x200] sm:$0xff]
        %v1577 = vld [vmem:[#allocation2 + $0x208] sm:$0xff]
        %v1578 = vld [vmem:[#allocation2 + $0x210] sm:$0xff]
        %v1579 = vld [vmem:[#allocation2 + $0x218] sm:$0xff]
        %v1580 = vld [vmem:[#allocation2 + $0x220] sm:$0xff]
        %v1581 = vld [vmem:[#allocation2 + $0x228] sm:$0xff]
        %v1582 = vld [vmem:[#allocation2 + $0x230] sm:$0xff]
        %v1583 = vld [vmem:[#allocation2 + $0x238] sm:$0xff]
        %v1584 = vld [vmem:[#allocation2 + $0x240] sm:$0xff]
        %v1585 = vld [vmem:[#allocation2 + $0x248] sm:$0xff]
        %v1586 = vld [vmem:[#allocation2 + $0x250] sm:$0xff]
        %v1587 = vld [vmem:[#allocation2 + $0x258] sm:$0xff]
        %v1588 = vld [vmem:[#allocation2 + $0x260] sm:$0xff]
        %v1589 = vld [vmem:[#allocation2 + $0x268] sm:$0xff]
        %v1590 = vld [vmem:[#allocation2 + $0x270] sm:$0xff]
        %v1591 = vld [vmem:[#allocation2 + $0x278] sm:$0xff]
        %v1592 = vld [vmem:[#allocation2 + $0x280] sm:$0xff]
        %v1593 = vld [vmem:[#allocation2 + $0x288] sm:$0xff]
        %v1594 = vld [vmem:[#allocation2 + $0x290] sm:$0xff]
        %v1595 = vld [vmem:[#allocation2 + $0x298] sm:$0xff]
        %v1596 = vld [vmem:[#allocation2 + $0x2a0] sm:$0xff]
        %v1597 = vld [vmem:[#allocation2 + $0x2a8] sm:$0xff]
        %v1598 = vld [vmem:[#allocation2 + $0x2b0] sm:$0xff]
        %v1599 = vld [vmem:[#allocation2 + $0x2b8] sm:$0xff]
        %v1600 = vld [vmem:[#allocation2 + $0x2c0] sm:$0xff]
        %v1601 = vld [vmem:[#allocation2 + $0x2c8] sm:$0xff]
        %v1602 = vld [vmem:[#allocation2 + $0x2d0] sm:$0xff]
        %v1603 = vld [vmem:[#allocation2 + $0x2d8] sm:$0xff]
        %v1604 = vld [vmem:[#allocation2 + $0x2e0] sm:$0xff]
        %v1605 = vld [vmem:[#allocation2 + $0x2e8] sm:$0xff]
        %v1606 = vld [vmem:[#allocation2 + $0x2f0] sm:$0xff]
        %v1607 = vld [vmem:[#allocation2 + $0x2f8] sm:$0xff]
        %v1608 = vld [vmem:[#allocation2 + $0x300] sm:$0xff]
        %v1609 = vld [vmem:[#allocation2 + $0x308] sm:$0xff]
        %v1610 = vld [vmem:[#allocation2 + $0x310] sm:$0xff]
        %v1611 = vld [vmem:[#allocation2 + $0x318] sm:$0xff]
        %v1612 = vld [vmem:[#allocation2 + $0x320] sm:$0xff]
        %v1613 = vld [vmem:[#allocation2 + $0x328] sm:$0xff]
        %v1614 = vld [vmem:[#allocation2 + $0x330] sm:$0xff]
        %v1615 = vld [vmem:[#allocation2 + $0x338] sm:$0xff]
        %v1616 = vld [vmem:[#allocation2 + $0x340] sm:$0xff]
        %v1617 = vld [vmem:[#allocation2 + $0x348] sm:$0xff]
        %v1618 = vld [vmem:[#allocation2 + $0x350] sm:$0xff]
        %v1619 = vld [vmem:[#allocation2 + $0x358] sm:$0xff]
        %v1620 = vpack.c.bf16 %v1515, %v1512
        %v1621 = vpack.c.bf16 %v1516, %v1513
        %v1622 = vpack.c.bf16 %v1517, %v1514
        %v1623 = vpack.c.bf16 %v1521, %v1518
        %v1624 = vpack.c.bf16 %v1522, %v1519
        %v1625 = vpack.c.bf16 %v1523, %v1520
        %v1626 = vpack.c.bf16 %v1527, %v1524
        %v1627 = vpack.c.bf16 %v1528, %v1525
        %v1628 = vpack.c.bf16 %v1529, %v1526
        %v1629 = vpack.c.bf16 %v1533, %v1530
        %v1630 = vpack.c.bf16 %v1534, %v1531
        %v1631 = vpack.c.bf16 %v1535, %v1532
        %v1632 = vpack.c.bf16 %v1539, %v1536
        %v1633 = vpack.c.bf16 %v1540, %v1537
        %v1634 = vpack.c.bf16 %v1541, %v1538
        %v1635 = vpack.c.bf16 %v1545, %v1542
        %v1636 = vpack.c.bf16 %v1546, %v1543
        %v1637 = vpack.c.bf16 %v1547, %v1544
        %v1638 = vpack.c.bf16 %v1551, %v1548
        %v1639 = vpack.c.bf16 %v1552, %v1549
        %v1640 = vpack.c.bf16 %v1553, %v1550
        %v1641 = vpack.c.bf16 %v1557, %v1554
        %v1642 = vpack.c.bf16 %v1558, %v1555
        %v1643 = vpack.c.bf16 %v1559, %v1556
        %v1644 = vpack.c.bf16 %v1563, %v1560
        %v1645 = vpack.c.bf16 %v1564, %v1561
        %v1646 = vpack.c.bf16 %v1565, %v1562
        %v1647 = vpack.c.bf16 %v1569, %v1566
        %v1648 = vpack.c.bf16 %v1570, %v1567
        %v1649 = vpack.c.bf16 %v1571, %v1568
        %v1650 = vpack.c.bf16 %v1575, %v1572
        %v1651 = vpack.c.bf16 %v1576, %v1573
        %v1652 = vpack.c.bf16 %v1577, %v1574
        %v1653 = vpack.c.bf16 %v1581, %v1578
        %v1654 = vpack.c.bf16 %v1582, %v1579
        %v1655 = vpack.c.bf16 %v1583, %v1580
        %v1656 = vpack.c.bf16 %v1587, %v1584
        %v1657 = vpack.c.bf16 %v1588, %v1585
        %v1658 = vpack.c.bf16 %v1589, %v1586
        %v1659 = vpack.c.bf16 %v1593, %v1590
        %v1660 = vpack.c.bf16 %v1594, %v1591
        %v1661 = vpack.c.bf16 %v1595, %v1592
        %v1662 = vpack.c.bf16 %v1599, %v1596
        %v1663 = vpack.c.bf16 %v1600, %v1597
        %v1664 = vpack.c.bf16 %v1601, %v1598
        %v1665 = vpack.c.bf16 %v1605, %v1602
        %v1666 = vpack.c.bf16 %v1606, %v1603
        %v1667 = vpack.c.bf16 %v1607, %v1604
        %v1668 = vpack.c.bf16 %v1611, %v1608
        %v1669 = vpack.c.bf16 %v1612, %v1609
        %v1670 = vpack.c.bf16 %v1613, %v1610
        %v1671 = vpack.c.bf16 %v1617, %v1614
        %v1672 = vpack.c.bf16 %v1618, %v1615
        %v1673 = vpack.c.bf16 %v1619, %v1616
        %v1674 = vld [vmem:[%s3] sm:$0xff]
        %v1675 = vld [vmem:[%s3 + $0x8] sm:$0xf]
        %v1676 = vld [vmem:[%s3 + $0xc] sm:$0xff]
        %v1677 = vld [vmem:[%s3 + $0x14] sm:$0xf]
        %v1678 = vld [vmem:[%s5] sm:$0xff]
        %v1679 = vld [vmem:[%s5 + $0x8] sm:$0xff]
        %1681 = vset.pattern.permute.xlu0 0
        %1682 = vperm.xlu0 %1681, %v1678
        %v1683 = vpop.permute.xlu0 %1682
        %1686 = vset.pattern.permute.xlu0 0
        %1687 = vperm.xlu0 %1686, %v1679
        %v1688 = vpop.permute.xlu0 %1687
        %v1694 = vunpack.c.l.b16 %v1674
        %v1695 = vunpack.c.h.b16 %v1674
        %v1696 = vunpack.c.l.b16 %v1675
        %v1697 = vunpack.c.l.b16 %v1676
        %v1698 = vunpack.c.h.b16 %v1676
        %v1699 = vunpack.c.l.b16 %v1677
        %v1700 = vpack.c.b16 %v1697, %v1694
        %v1701 = vpack.c.b16 %v1698, %v1695
        %v1702 = vpack.c.b16 %v1699, %v1696
        %vm1705 = vcmask 261120
        %v1707 = vsel %vm1705, %v1702, 0
        %1709 = vmatprep.subr.bf16.mxu0 %v1621
        %1710 = vmatpush1.bf16.msra.mxu0 %v1620
        %1711 = vmatprep.subr.bf16.mxu0 %v1624
        %1712 = vmatpush1.bf16.msra.mxu0 %v1623
        %1713 = vmatprep.subr.bf16.mxu0 %v1627
        %1714 = vmatpush1.bf16.msra.mxu0 %v1626
        %1715 = vmatprep.subr.bf16.mxu0 %v1630
        %1716 = vmatpush1.bf16.msra.mxu0 %v1629
        %1717 = vmatprep.subr.bf16.mxu0 %v1633
        %1718 = vmatpush1.bf16.msra.mxu0 %v1632
        %1719 = vmatprep.subr.bf16.mxu0 %v1636
        %1720 = vmatpush1.bf16.msra.mxu0 %v1635
        %1721 = vmatprep.subr.bf16.mxu0 %v1639
        %1722 = vmatpush1.bf16.msra.mxu0 %v1638
        %1723 = vmatprep.subr.bf16.mxu0 %v1642
        %1724 = vmatpush1.bf16.msra.mxu0 %v1641
        %1725 = vmatprep.subr.bf16.mxu0 %v1645
        %1726 = vmatpush1.bf16.msra.mxu0 %v1644
        %1727 = vmatprep.subr.bf16.mxu0 %v1648
        %1728 = vmatpush1.bf16.msra.mxu0 %v1647
        %1729 = vmatprep.subr.bf16.mxu0 %v1651
        %1730 = vmatpush1.bf16.msra.mxu0 %v1650
        %1731 = vmatprep.subr.bf16.mxu0 %v1654
        %1732 = vmatpush1.bf16.msra.mxu0 %v1653
        %1733 = vmatprep.subr.bf16.mxu0 %v1657
        %1734 = vmatpush1.bf16.msra.mxu0 %v1656
        %1735 = vmatprep.subr.bf16.mxu0 %v1660
        %1736 = vmatpush1.bf16.msra.mxu0 %v1659
        %1737 = vmatprep.subr.bf16.mxu0 %v1663
        %1738 = vmatpush1.bf16.msra.mxu0 %v1662
        %1739 = vmatprep.subr.bf16.mxu0 %v1666
        %1740 = vmatpush1.bf16.msra.mxu0 %v1665
        %1741 = vmatprep.mubr.bf16.mxu0 %v1701
        %1742 = vmatmul.mubr.bf16.gmra.mrb[0].mxu0 %v1700
        %v1743 = vpop.f32.mrb[0].mxu0
        %v1744 = vadd.f32 %v1683, %v1743
        %v1745 = vpop.f32.mrb[0].mxu0
        %v1746 = vadd.f32 %v1683, %v1745
        %v1747 = vpop.f32.mrb[0].mxu0
        %v1748 = vadd.f32 %v1688, %v1747
        %v1749 = vpop.f32.mrb[0].mxu0
        %v1750 = vadd.f32 %v1688, %v1749
        %1751 = vdwg.mxu0
        %1752 = vmatprep.subr.bf16.mxu0 %v1669
        %1753 = vmatpush1.bf16.msra.mxu0 %v1668
        %1754 = vmatprep.subr.bf16.mxu0 %v1672
        %1755 = vmatpush1.bf16.msra.mxu0 %v1671
        %1756 = vmatprep.subr.bf16.mxu0 0
        %1757 = vmatpush1.bf16.msra.mxu0 0
        %1758 = vmatprep.subr.bf16.mxu0 0
        %1759 = vmatpush1.bf16.msra.mxu0 0
        %1760 = vmatprep.subr.bf16.mxu0 0
        %1761 = vmatpush1.bf16.msra.mxu0 0
        %1762 = vmatprep.subr.bf16.mxu0 0
        %1763 = vmatpush1.bf16.msra.mxu0 0
        %1764 = vmatprep.subr.bf16.mxu0 0
        %1765 = vmatpush1.bf16.msra.mxu0 0
        %1766 = vmatprep.subr.bf16.mxu0 0
        %1767 = vmatpush1.bf16.msra.mxu0 0
        %1768 = vmatprep.subr.bf16.mxu0 0
        %1769 = vmatpush1.bf16.msra.mxu0 0
        %1770 = vmatprep.subr.bf16.mxu0 0
        %1771 = vmatpush1.bf16.msra.mxu0 0
        %1772 = vmatprep.subr.bf16.mxu0 0
        %1773 = vmatpush1.bf16.msra.mxu0 0
        %1774 = vmatprep.subr.bf16.mxu0 0
        %1775 = vmatpush1.bf16.msra.mxu0 0
        %1776 = vmatprep.subr.bf16.mxu0 0
        %1777 = vmatpush1.bf16.msra.mxu0 0
        %1778 = vmatprep.subr.bf16.mxu0 0
        %1779 = vmatpush1.bf16.msra.mxu0 0
        %1780 = vmatprep.subr.bf16.mxu0 0
        %1781 = vmatpush1.bf16.msra.mxu0 0
        %1782 = vmatprep.subr.bf16.mxu0 0
        %1783 = vmatpush1.bf16.msra.mxu0 0
        %1784 = vmatprep.mubr.bf16.mxu0 0
        %1785 = vmatmul.mubr.bf16.gmra.mrb[0].mxu0 %v1707
        %v1786 = vpop.f32.mrb[0].mxu0
        %v1787 = vadd.f32 %v1744, %v1786
        %v1788 = vpop.f32.mrb[0].mxu0
        %v1789 = vadd.f32 %v1746, %v1788
        %v1790 = vpop.f32.mrb[0].mxu0
        %v1791 = vadd.f32 %v1748, %v1790
        %v1792 = vpop.f32.mrb[0].mxu0
        %v1793 = vadd.f32 %v1750, %v1792
        %1794 = vdwg.mxu0
        %1795 = vmatprep.subr.bf16.mxu0 0
        %1796 = vmatpush1.bf16.msra.mxu0 %v1622
        %1797 = vmatprep.subr.bf16.mxu0 0
        %1798 = vmatpush1.bf16.msra.mxu0 %v1625
        %1799 = vmatprep.subr.bf16.mxu0 0
        %1800 = vmatpush1.bf16.msra.mxu0 %v1628
        %1801 = vmatprep.subr.bf16.mxu0 0
        %1802 = vmatpush1.bf16.msra.mxu0 %v1631
        %1803 = vmatprep.subr.bf16.mxu0 0
        %1804 = vmatpush1.bf16.msra.mxu0 %v1634
        %1805 = vmatprep.subr.bf16.mxu0 0
        %1806 = vmatpush1.bf16.msra.mxu0 %v1637
        %1807 = vmatprep.subr.bf16.mxu0 0
        %1808 = vmatpush1.bf16.msra.mxu0 %v1640
        %1809 = vmatprep.subr.bf16.mxu0 0
        %1810 = vmatpush1.bf16.msra.mxu0 %v1643
        %1811 = vmatprep.subr.bf16.mxu0 0
        %1812 = vmatpush1.bf16.msra.mxu0 %v1646
        %1813 = vmatprep.subr.bf16.mxu0 0
        %1814 = vmatpush1.bf16.msra.mxu0 %v1649
        %1815 = vmatprep.subr.bf16.mxu0 0
        %1816 = vmatpush1.bf16.msra.mxu0 %v1652
        %1817 = vmatprep.subr.bf16.mxu0 0
        %1818 = vmatpush1.bf16.msra.mxu0 %v1655
        %1819 = vmatprep.subr.bf16.mxu0 0
        %1820 = vmatpush1.bf16.msra.mxu0 %v1658
        %1821 = vmatprep.subr.bf16.mxu0 0
        %1822 = vmatpush1.bf16.msra.mxu0 %v1661
        %1823 = vmatprep.subr.bf16.mxu0 0
        %1824 = vmatpush1.bf16.msra.mxu0 %v1664
        %1825 = vmatprep.subr.bf16.mxu0 0
        %1826 = vmatpush1.bf16.msra.mxu0 %v1667
        %1827 = vmatprep.mubr.bf16.mxu0 %v1701
        %1828 = vmatmul.mubr.bf16.gmra.mrb[0].mxu0 %v1700
        %v1829 = vpop.f32.mrb[0].mxu0
        %v1830 = vadd.f32 %v1683, %v1829
        %v1831 = vpop.f32.mrb[0].mxu0
        %v1832 = vpop.f32.mrb[0].mxu0
        %v1833 = vadd.f32 %v1688, %v1832
        %v1834 = vpop.f32.mrb[0].mxu0
        %1835 = vdwg.mxu0
        %1836 = vmatprep.subr.bf16.mxu0 0
        %1837 = vmatpush1.bf16.msra.mxu0 %v1670
        %1838 = vmatprep.subr.bf16.mxu0 0
        %1839 = vmatpush1.bf16.msra.mxu0 %v1673
        %1840 = vmatprep.subr.bf16.mxu0 0
        %1841 = vmatpush1.bf16.msra.mxu0 0
        %1842 = vmatprep.subr.bf16.mxu0 0
        %1843 = vmatpush1.bf16.msra.mxu0 0
        %1844 = vmatprep.subr.bf16.mxu0 0
        %1845 = vmatpush1.bf16.msra.mxu0 0
        %1846 = vmatprep.subr.bf16.mxu0 0
        %1847 = vmatpush1.bf16.msra.mxu0 0
        %1848 = vmatprep.subr.bf16.mxu0 0
        %1849 = vmatpush1.bf16.msra.mxu0 0
        %1850 = vmatprep.subr.bf16.mxu0 0
        %1851 = vmatpush1.bf16.msra.mxu0 0
        %1852 = vmatprep.subr.bf16.mxu0 0
        %1853 = vmatpush1.bf16.msra.mxu0 0
        %1854 = vmatprep.subr.bf16.mxu0 0
        %1855 = vmatpush1.bf16.msra.mxu0 0
        %1856 = vmatprep.subr.bf16.mxu0 0
        %1857 = vmatpush1.bf16.msra.mxu0 0
        %1858 = vmatprep.subr.bf16.mxu0 0
        %1859 = vmatpush1.bf16.msra.mxu0 0
        %1860 = vmatprep.subr.bf16.mxu0 0
        %1861 = vmatpush1.bf16.msra.mxu0 0
        %1862 = vmatprep.subr.bf16.mxu0 0
        %1863 = vmatpush1.bf16.msra.mxu0 0
        %1864 = vmatprep.subr.bf16.mxu0 0
        %1865 = vmatpush1.bf16.msra.mxu0 0
        %1866 = vmatprep.subr.bf16.mxu0 0
        %1867 = vmatpush1.bf16.msra.mxu0 0
        %1868 = vmatprep.mubr.bf16.mxu0 0
        %1869 = vmatmul.mubr.bf16.gmra.mrb[0].mxu0 %v1707
        %v1870 = vpop.f32.mrb[0].mxu0
        %v1871 = vadd.f32 %v1830, %v1870
        %v1872 = vpop.f32.mrb[0].mxu0
        %v1873 = vpop.f32.mrb[0].mxu0
        %v1874 = vadd.f32 %v1833, %v1873
        %v1875 = vpop.f32.mrb[0].mxu0
        %1876 = vdwg.mxu0
        %v1877 = vsel %vm679, %v1787, 0.0
        %v1878 = vsel %vm680, %v1789, 0.0
        %v1879 = vsel %vm681, %v1871, 0.0
        %v1880 = vsel %vm679, %v1791, 0.0
        %v1881 = vsel %vm680, %v1793, 0.0
        %v1882 = vsel %vm681, %v1874, 0.0
        %1883 = vst [vmem:[%s259] sm:$0xff] %v1877
        %1884 = vst [vmem:[%s259 + $0x8] sm:$0xff] %v1878
        %1885 = vst.msk [vmem:[%s259 + $0x10] sm:$0xff] %vm272, %v1879
        %1886 = vst [vmem:[%s259 + $0x18] sm:$0xff] %v1880
        %1887 = vst [vmem:[%s259 + $0x20] sm:$0xff] %v1881
        %1888 = vst.msk [vmem:[%s259 + $0x28] sm:$0xff] %vm272, %v1882
        %s1889 = sand.u32 %s160, 1
        %s1890 = scalar_lea.sflag [#allocation6], %s1889
        %s1891 = sand.u32 %s160, 1
        %s1892 = smul.addr %s1891, 48
        %s1893 = scalar_lea.vmem [#allocation7], %s1892
        // Predicated region
        $region49: #{tpu_custom_call.1} parent=43 // pred_check
          %p1894 = pneg %p170
        $region50: #{tpu_custom_call.1} parent=43 // pred_check_branch
          %1896 = sbr.rel (%p1894) target = $region52
        $region51: #{tpu_custom_call.1} parent=43 // pred_region
          %s1898 = ssub.s32 768, 768
          %1899 = vsyncadd %s1890, %s1898
          %s1900 = smul.addr %s21, 6
          %s1901 = smul.addr %s1900, 128
          %s1902 = scalar_lea.hbm %s6, %s1901
          %s1903 = sshll.u32 %s1893, 4
          %s1904 = int_to_ptr.vmem [resolvable:$true] %s1903
          %1909 = dma.vmem_to_hbm [thread:$0]  %s1904, 768, %s1902, %s1890, 384, 384, 24
        $region52: #{tpu_custom_call.1} parent=43 // pred_fallthru
          _
      $region44: #{tpu_custom_call.1} parent=5 // pred_fallthru
        _
      %p1910 = scmp.le.s32.totalorder 2, %s16
      // Predicated region
      $region53: #{tpu_custom_call.1} parent=5 // pred_check
        %p1911 = pneg %p1910
      $region54: #{tpu_custom_call.1} parent=5 // pred_check_branch
        %1913 = sbr.rel (%p1911) target = $region56
      $region55: #{tpu_custom_call.1} parent=5 // pred_region
        %s1914 = ssub.s32 %s16, 2
        // Predicated region
        $region57: #{tpu_custom_call.1} parent=55 // pred_check
          %p1915 = pneg %p176
        $region58: #{tpu_custom_call.1} parent=55 // pred_check_branch
          %1917 = sbr.rel (%p1915) target = $region60
        $region59: #{tpu_custom_call.1} parent=55 // pred_region
          %s1918 = sand.u32 %s161, 1
          %s1919 = scalar_lea.sflag [#allocation6], %s1918
          %s1920 = sand.u32 %s161, 1
          %s1921 = smul.addr %s1920, 48
          %s1922 = scalar_lea.vmem [#allocation7], %s1921
          %1923 = dma.done %s1919, 768
        $region60: #{tpu_custom_call.1} parent=55 // pred_fallthru
          _
      $region56: #{tpu_custom_call.1} parent=5 // pred_fallthru
        _
    $region6: #{tpu_custom_call.1} parent=1 // loop_footer
      %s20 = sadd.s32 1, %s16
    $region7: #{tpu_custom_call.1} parent=1 // loop_footer_branch
      %15 = sbr.rel target = $region3
    $region8: #{tpu_custom_call.1} parent=1 // loop_exit
      _
    %1924 = vsyncpa [#allocation5], 1
    %s1925 = scalar_lea.sflag [#allocation5], 1
    %1926 = vsyncpa %s1925, 1
    %1927 = vsyncpa [#allocation6], 1
    %s1928 = scalar_lea.sflag [#allocation6], 1
    %1929 = vsyncpa %s1928, 1

</llo_original>
